<compile_context>
chip_gen: v7x
topology: tpu7x:2x2x1
jax: 0.10.0
libtpu: 0.0.40
codegen_flags: <defaults>
</compile_context>

<pallas_src>
import jax
import jax.numpy as jnp
from jax.experimental import pallas as pl
from jax.experimental.pallas import tpu as pltpu

EPS = 1e-5
_CONCAT_CIN_MAX = 128          # below this, use the single K=9*cin matmul


def _vmem_limits():
    """(per-step working-set budget, vmem_limit_bytes), TPU-generation aware."""
    cap = None
    try:
        cap = int(pltpu.get_tpu_info().vmem_capacity_bytes)
    except Exception:
        cap = None
    if cap is None:
        cap = 128 * 1024 * 1024
    if cap >= 100 * 1024 * 1024:                       # v5e / v6e: 128 MiB VMEM
        budget, limit = 48 * 1024 * 1024, 80 * 1024 * 1024
    else:                                              # v7x: 64 MiB per TensorCore
        budget, limit = 24 * 1024 * 1024, 44 * 1024 * 1024
    return budget, min(limit, (cap * 3) // 4)


def _pick_block_rows(h, w, cin, cout, budget):
    """Pick hi (input rows per block; output rows hb = 2*hi) that fits VMEM."""
    wu = 2 * w
    use_concat = cin < _CONCAT_CIN_MAX
    w_res = 2 * 9 * cin * cout * 2                     # resident weight tile (dbuf)
    margin = 4 * 1024 * 1024                           # compiler / relayout scratch

    def fits(hi):
        hb, hbw = 2 * hi, 2 * hi * wu
        in_b = 2 * (hi + 2) * (wu + 2) * cin * 2       # double-buffered bf16 input tile
        up_b = 2 * (hb + 2) * (wu + 2) * cin * 2       # upsampled tile + tap staging
        patch_b = hbw * 9 * cin * 2 if use_concat else 2 * hbw * cin * 2
        acc_b = hbw * cout * 4                         # f32 accumulator
        out_b = 2 * hbw * cout * 2 + 2 * hbw * cout * 4  # k1 bf16 out + k2 f32 out (dbuf)
        return w_res + margin + in_b + up_b + patch_b + acc_b + out_b <= budget

    divs = [d for d in range(1, h + 1) if h % d == 0]
    lane_ok = lambda d: (d == h) or (2 * d * wu) % 128 == 0   # lane-aligned row blocks
    ok = [d for d in divs if lane_ok(d) and fits(d)]
    if ok:
        multi = [d for d in ok if h // d >= 2]         # keep >=2 row blocks (v7x 2 TCs)
        return max(multi) if multi else max(ok)
    return min(d for d in divs if lane_ok(d))          # nothing fits: smallest valid


# --------------------------------------------------------------------------
# Kernel 1: in-kernel 2x height upsample + halo, 3x3 conv (MXU), fused BN stats
# --------------------------------------------------------------------------
def _make_conv_bnstats_kernel(hi, w, cin, cout):
    hb, wu = 2 * hi, 2 * w
    hbw = hb * wu
    use_concat = cin < _CONCAT_CIN_MAX

    def kernel(x_ref, w_ref, y_ref, st_ref):
        # x_ref : (1, 1, hi+2, wu+2, cin) bf16  width-upsampled, zero-padded row block
        # w_ref : (9*cin, cout)           bf16  tap-major 3x3 weights (resident)
        # y_ref : (1, hbw, cout)          bf16  conv output, row-major over (hb, wu)
        # st_ref: (1, 1, 2, cout)         f32   per-block (sum, centered M2)
        t = x_ref[0, 0]                                            # (hi+2, wu+2, cin)
        # nearest 2x height upsample (leading-dim broadcast + leading reshape),
        # then crop to the 1px halo window of this output row block.
        th = jnp.broadcast_to(t[:, None], (hi + 2, 2, wu + 2, cin))
        th = th.reshape(2 * hi + 4, wu + 2, cin)
        up = th[1:hb + 3]                                          # (hb+2, wu+2, cin)

        if use_concat:
            cols = jnp.concatenate(
                [up[kh:kh + hb, kw:kw + wu, :]
                 for kh in range(3) for kw in range(3)], axis=-1)  # (hb, wu, 9*cin)
            acc = jnp.dot(cols.reshape(hbw, 9 * cin), w_ref[...],
                          preferred_element_type=jnp.float32)      # (hbw, cout)
        else:
            acc = jnp.zeros((hbw, cout), jnp.float32)
            for kh in range(3):
                for kw in range(3):
                    tap = up[kh:kh + hb, kw:kw + wu, :].reshape(hbw, cin)
                    k0 = (kh * 3 + kw) * cin
                    acc = acc + jnp.dot(tap, w_ref[k0:k0 + cin, :],
                                        preferred_element_type=jnp.float32)

        y_ref[0] = acc.astype(jnp.bfloat16)
        s = jnp.sum(acc, axis=0, keepdims=True)                    # (1, cout)
        d = acc - s * (1.0 / hbw)                                  # centered in-kernel
        m2 = jnp.sum(d * d, axis=0, keepdims=True)                 # (1, cout)
        st_ref[0, 0] = jnp.concatenate([s, m2], axis=0)            # (2, cout)

    return kernel


# --------------------------------------------------------------------------
# Kernel 2: BN-apply + ReLU + NHWC->NCHW transpose (lane-dense f32 stores)
# --------------------------------------------------------------------------
def _bn_relu_nchw_kernel(y_ref, sc_ref, sh_ref, o_ref):
    # y_ref : (1, hbw, cout) bf16; sc/sh: (1, cout) f32; o_ref: (1, cout, hbw) f32
    y = y_ref[0].astype(jnp.float32) * sc_ref[...] + sh_ref[...]
    y = jnp.maximum(y, 0.0)
    o_ref[0] = jnp.transpose(y)                       # (cout, hbw), lane dim = hbw


# --------------------------------------------------------------------------
# Full up_conv forward
# --------------------------------------------------------------------------
def up_conv_forward(x_nchw, params, block_rows=None):
    """Upsample(2x nearest) -> Conv3x3(pad=1) -> BatchNorm(batch stats) -> ReLU, NCHW."""
    n, cin, h, w = x_nchw.shape
    cout = params["w"].shape[-1]
    hu, wu = 2 * h, 2 * w

    budget, vmem_limit = _vmem_limits()
    if block_rows is None:
        hi = _pick_block_rows(h, w, cin, cout, budget)
    else:
        assert block_rows % 2 == 0 and h % (block_rows // 2) == 0
        hi = block_rows // 2
    hb = 2 * hi
    rb = h // hi
    hbw = hb * wu
    assert rb == 1 or hbw % 128 == 0, "row block must be a multiple of 128 output pixels"

    # Cheap host prep on the ORIGINAL-resolution bf16 tensor only (single cast):
    xh = jnp.transpose(x_nchw, (0, 2, 3, 1)).astype(jnp.bfloat16)   # NHWC
    xh = jnp.repeat(xh, 2, axis=2)                                  # width 2x nearest
    xp = jnp.pad(xh, ((0, 0), (1, 1), (1, 1), (0, 0)))              # (n, h+2, wu+2, cin)
    row_idx = jnp.arange(rb)[:, None] * hi + jnp.arange(hi + 2)[None, :]
    xblk = xp[:, row_idx]                                           # (n, rb, hi+2, wu+2, cin)

    wmat = params["w"].reshape(9 * cin, cout).astype(jnp.bfloat16)
    # conv bias omitted on purpose: it cancels exactly under training-mode BN.

    cparams = pltpu.CompilerParams(
        dimension_semantics=("parallel", "parallel"),
        vmem_limit_bytes=vmem_limit)

    y_flat, stats = pl.pallas_call(
        _make_conv_bnstats_kernel(hi, w, cin, cout),
        out_shape=(jax.ShapeDtypeStruct((n, hu * wu, cout), jnp.bfloat16),
                   jax.ShapeDtypeStruct((n, rb, 2, cout), jnp.float32)),
        grid_spec=pltpu.PrefetchScalarGridSpec(
            num_scalar_prefetch=0,
            grid=(n, rb),
            in_specs=[
                pl.BlockSpec((1, 1, hi + 2, wu + 2, cin),
                             lambda i, r: (i, r, 0, 0, 0)),
                pl.BlockSpec((9 * cin, cout), lambda i, r: (0, 0)),
            ],
            out_specs=[
                pl.BlockSpec((1, hbw, cout), lambda i, r: (i, r, 0)),
                pl.BlockSpec((1, 1, 2, cout), lambda i, r: (i, r, 0, 0)),
            ],
        ),
        compiler_params=cparams,
    )(xblk, wmat)

    # Training-mode BN statistics: Chan's combine of per-block centered sums
    # (tiny host-side reduction over n*rb*2*cout values, numerically stable).
    cb = float(hbw)
    count = float(n * hu * wu)
    s_b = stats[:, :, 0, :]                       # (n, rb, cout) block sums
    m2_b = stats[:, :, 1, :]                      # (n, rb, cout) centered M2
    mean_b = s_b / cb
    mean = jnp.sum(s_b, axis=(0, 1)) / count
    m2 = jnp.sum(m2_b, axis=(0, 1)) + cb * jnp.sum((mean_b - mean) ** 2, axis=(0, 1))
    var = jnp.maximum(m2 / count, 0.0)            # biased variance (PyTorch BN forward)
    scale = params["gamma"] * jax.lax.rsqrt(var + EPS)
    shift = params["beta"] - mean * scale

    out_flat = pl.pallas_call(
        _bn_relu_nchw_kernel,
        out_shape=jax.ShapeDtypeStruct((n, cout, hu * wu), jnp.float32),
        grid_spec=pltpu.PrefetchScalarGridSpec(
            num_scalar_prefetch=0,
            grid=(n, rb),
            in_specs=[
                pl.BlockSpec((1, hbw, cout), lambda i, r: (i, r, 0)),
                pl.BlockSpec((1, cout), lambda i, r: (0, 0)),
                pl.BlockSpec((1, cout), lambda i, r: (0, 0)),
            ],
            out_specs=pl.BlockSpec((1, cout, hbw), lambda i, r: (i, 0, r)),
        ),
        compiler_params=cparams,
    )(y_flat, scale.reshape(1, cout), shift.reshape(1, cout))

    # NCHW result; (n, cout, hu*wu) -> (n, cout, hu, wu) is a free reshape in XLA.
    # TODO(synk): BatchNorm running_mean/running_var momentum updates are module
    # state, not part of the forward output; skipped.
    return out_flat.reshape(n, cout, hu, wu)


def init_params(key, channels_in, channels_out):
    k1, k2 = jax.random.split(key)
    fan = channels_in * 9
    bound = 1.0 / jnp.sqrt(float(fan))
    return {
        "w": jax.random.uniform(k1, (3, 3, channels_in, channels_out),
                                jnp.float32, -bound, bound),
        "b": jax.random.uniform(k2, (channels_out,), jnp.float32, -bound, bound),
        "gamma": jnp.ones((channels_out,), jnp.float32),
        "beta": jnp.zeros((channels_out,), jnp.float32),
    }


def _reference(x_nchw, params):
    """Pure-JAX f32 reference of the PyTorch module (training-mode BN)."""
    x = jnp.transpose(x_nchw, (0, 2, 3, 1))
    x = jnp.repeat(jnp.repeat(x, 2, axis=1), 2, axis=2)
    y = jax.lax.conv_general_dilated(
        x, params["w"], window_strides=(1, 1), padding=((1, 1), (1, 1)),
        dimension_numbers=("NHWC", "HWIO", "NHWC"))
    y = y + params["b"]
    mean = jnp.mean(y, axis=(0, 1, 2))
    var = jnp.mean((y - mean) ** 2, axis=(0, 1, 2))
    y = (y - mean) * jax.lax.rsqrt(var + EPS) * params["gamma"] + params["beta"]
    y = jnp.maximum(y, 0.0)
    return jnp.transpose(y, (0, 3, 1, 2))


if __name__ == "__main__":
    key = jax.random.PRNGKey(0)
    kp, kx = jax.random.split(key)

    n, cin, h, w = 2, 4, 16, 16
    cout = 8

    params = init_params(kp, cin, cout)
    x = jax.random.normal(kx, (n, cin, h, w), jnp.float32)

    fwd = jax.jit(up_conv_forward)
    out = fwd(x, params)          # auto tiling picks hb=16 -> 2 row blocks (halo path)
    jax.block_until_ready(out)

    assert out.shape == (n, cout, 2 * h, 2 * w)
    assert out.dtype == jnp.float32

    ref = _reference(x, params)
    assert jnp.allclose(out, ref, atol=5e-2, rtol=5e-2), "mismatch vs f32 reference"

    print("KERNEL_OK")
</pallas_src>

<mosaic_0001>
module attributes {stable_mosaic.version = 11 : i64} {
  func.func @kernel(%arg0: i32, %arg1: i32, %arg2: memref<1x1x10x34x4xbf16, #tpu.memory_space<vmem>>, %arg3: memref<36x8xbf16, #tpu.memory_space<vmem>>, %arg4: memref<1x512x8xbf16, #tpu.memory_space<vmem>>, %arg5: memref<1x1x2x8xf32, #tpu.memory_space<vmem>>) attributes {dimension_semantics = [#tpu.dimension_semantics<parallel>, #tpu.dimension_semantics<parallel>], iteration_bounds = array<i64: 2, 2>, scalar_prefetch = 0 : i64, scratch_operands = 0 : i64, tpu.core_type = #tpu.core_type<tc>, window_params = [{transform_indices = @transform_0, window_bounds = array<i64: 1, 1, 10, 34, 4>}, {pipeline_mode = #tpu.pipeline_mode<synchronous>, transform_indices = @transform_1, window_bounds = array<i64: 36, 8>}, {transform_indices = @transform_2, window_bounds = array<i64: 1, 512, 8>}, {transform_indices = @transform_3, window_bounds = array<i64: 1, 1, 2, 8>}]} {
    %c0 = arith.constant 0 : index
    %c0_0 = arith.constant 0 : index
    %c0_1 = arith.constant 0 : index
    %c0_2 = arith.constant 0 : index
    %c0_3 = arith.constant 0 : index
    %0 = vector.load %arg2[%c0, %c0_0, %c0_1, %c0_2, %c0_3] : memref<1x1x10x34x4xbf16, #tpu.memory_space<vmem>>, vector<1x1x10x34x4xbf16>
    %1 = vector.shape_cast %0 : vector<1x1x10x34x4xbf16> to vector<10x34x4xbf16>
    %2 = vector.shape_cast %1 : vector<10x34x4xbf16> to vector<10x1x34x4xbf16>
    %3 = vector.shape_cast %2 : vector<10x1x34x4xbf16> to vector<10x1x34x4xbf16>
    %4 = vector.broadcast %3 : vector<10x1x34x4xbf16> to vector<10x2x34x4xbf16>
    %5 = vector.shape_cast %4 : vector<10x2x34x4xbf16> to vector<20x34x4xbf16>
    %6 = vector.extract_strided_slice %5 {offsets = [1, 0, 0], sizes = [18, 34, 4], strides = [1, 1, 1]} : vector<20x34x4xbf16> to vector<18x34x4xbf16>
    %7 = vector.extract_strided_slice %6 {offsets = [0, 0, 0], sizes = [16, 32, 4], strides = [1, 1, 1]} : vector<18x34x4xbf16> to vector<16x32x4xbf16>
    %8 = vector.extract_strided_slice %6 {offsets = [0, 1, 0], sizes = [16, 32, 4], strides = [1, 1, 1]} : vector<18x34x4xbf16> to vector<16x32x4xbf16>
    %9 = vector.extract_strided_slice %6 {offsets = [0, 2, 0], sizes = [16, 32, 4], strides = [1, 1, 1]} : vector<18x34x4xbf16> to vector<16x32x4xbf16>
    %10 = vector.extract_strided_slice %6 {offsets = [1, 0, 0], sizes = [16, 32, 4], strides = [1, 1, 1]} : vector<18x34x4xbf16> to vector<16x32x4xbf16>
    %11 = vector.extract_strided_slice %6 {offsets = [1, 1, 0], sizes = [16, 32, 4], strides = [1, 1, 1]} : vector<18x34x4xbf16> to vector<16x32x4xbf16>
    %12 = vector.extract_strided_slice %6 {offsets = [1, 2, 0], sizes = [16, 32, 4], strides = [1, 1, 1]} : vector<18x34x4xbf16> to vector<16x32x4xbf16>
    %13 = vector.extract_strided_slice %6 {offsets = [2, 0, 0], sizes = [16, 32, 4], strides = [1, 1, 1]} : vector<18x34x4xbf16> to vector<16x32x4xbf16>
    %14 = vector.extract_strided_slice %6 {offsets = [2, 1, 0], sizes = [16, 32, 4], strides = [1, 1, 1]} : vector<18x34x4xbf16> to vector<16x32x4xbf16>
    %15 = vector.extract_strided_slice %6 {offsets = [2, 2, 0], sizes = [16, 32, 4], strides = [1, 1, 1]} : vector<18x34x4xbf16> to vector<16x32x4xbf16>
    %16 = tpu.concatenate %7, %8, %9, %10, %11, %12, %13, %14, %15 in 2 : vector<16x32x4xbf16>, vector<16x32x4xbf16>, vector<16x32x4xbf16>, vector<16x32x4xbf16>, vector<16x32x4xbf16>, vector<16x32x4xbf16>, vector<16x32x4xbf16>, vector<16x32x4xbf16>, vector<16x32x4xbf16> -> vector<16x32x36xbf16>
    %17 = vector.shape_cast %16 : vector<16x32x36xbf16> to vector<512x36xbf16>
    %c0_4 = arith.constant 0 : index
    %c0_5 = arith.constant 0 : index
    %18 = vector.load %arg3[%c0_4, %c0_5] : memref<36x8xbf16, #tpu.memory_space<vmem>>, vector<36x8xbf16>
    %cst = arith.constant dense<0.000000e+00> : vector<512x8xf32>
    %19 = tpu.matmul %17, %18, %cst {dimension_numbers = #tpu.dot_dimension_numbers<[1], [0], [0], [1], [0, 0, 1, 1], [], []>} : vector<512x36xbf16>, vector<36x8xbf16>, vector<512x8xf32> -> vector<512x8xf32>
    %20 = arith.truncf %19 : vector<512x8xf32> to vector<512x8xbf16>
    %c0_6 = arith.constant 0 : index
    %c0_7 = arith.constant 0 : index
    %c0_8 = arith.constant 0 : index
    %21 = vector.load %arg4[%c0_6, %c0_7, %c0_8] : memref<1x512x8xbf16, #tpu.memory_space<vmem>>, vector<1x512x8xbf16>
    %22 = vector.shape_cast %21 : vector<1x512x8xbf16> to vector<512x8xbf16>
    %23 = vector.shape_cast %20 : vector<512x8xbf16> to vector<1x512x8xbf16>
    tpu.vector_store %arg4[%c0_6, %c0_7, %c0_8], %23 {strides = array<i32>} : memref<1x512x8xbf16, #tpu.memory_space<vmem>>, vector<1x512x8xbf16>,
    %cst_9 = arith.constant dense<0.000000e+00> : vector<8xf32>
    %24 = vector.multi_reduction <add>, %19, %cst_9 [0] : vector<512x8xf32> to vector<8xf32>
    %25 = vector.shape_cast %24 : vector<8xf32> to vector<1x8xf32>
    %cst_10 = arith.constant 0.001953125 : f32
    %26 = vector.broadcast %cst_10 : f32 to vector<1x8xf32>
    %27 = arith.mulf %25, %26 : vector<1x8xf32>
    %28 = vector.broadcast %27 : vector<1x8xf32> to vector<512x8xf32>
    %29 = arith.subf %19, %28 : vector<512x8xf32>
    %30 = arith.mulf %29, %29 : vector<512x8xf32>
    %cst_11 = arith.constant dense<0.000000e+00> : vector<8xf32>
    %31 = vector.multi_reduction <add>, %30, %cst_11 [0] : vector<512x8xf32> to vector<8xf32>
    %32 = vector.shape_cast %31 : vector<8xf32> to vector<1x8xf32>
    %33 = tpu.concatenate %25, %32 in 0 : vector<1x8xf32>, vector<1x8xf32> -> vector<2x8xf32>
    %c0_12 = arith.constant 0 : index
    %c0_13 = arith.constant 0 : index
    %c0_14 = arith.constant 0 : index
    %c0_15 = arith.constant 0 : index
    %34 = vector.load %arg5[%c0_12, %c0_13, %c0_14, %c0_15] : memref<1x1x2x8xf32, #tpu.memory_space<vmem>>, vector<1x1x2x8xf32>
    %35 = vector.shape_cast %34 : vector<1x1x2x8xf32> to vector<2x8xf32>
    %36 = vector.shape_cast %33 : vector<2x8xf32> to vector<1x1x2x8xf32>
    tpu.vector_store %arg5[%c0_12, %c0_13, %c0_14, %c0_15], %36 {strides = array<i32>} : memref<1x1x2x8xf32, #tpu.memory_space<vmem>>, vector<1x1x2x8xf32>,
    return
  }
  func.func @transform_0(%arg0: i32, %arg1: i32) -> (i32, i32, i32, i32, i32) {
    %c0_i32 = arith.constant 0 : i32
    %c0_i32_0 = arith.constant 0 : i32
    %c0_i32_1 = arith.constant 0 : i32
    %c0_i32_2 = arith.constant 0 : i32
    return %arg0, %arg1, %c0_i32, %c0_i32_0, %c0_i32_1 : i32, i32, i32, i32, i32
  }
  func.func @transform_1(%arg0: i32, %arg1: i32) -> (i32, i32) {
    %c0_i32 = arith.constant 0 : i32
    %c0_i32_0 = arith.constant 0 : i32
    %c0_i32_1 = arith.constant 0 : i32
    return %c0_i32, %c0_i32_0 : i32, i32
  }
  func.func @transform_2(%arg0: i32, %arg1: i32) -> (i32, i32, i32) {
    %c0_i32 = arith.constant 0 : i32
    %c0_i32_0 = arith.constant 0 : i32
    return %arg0, %arg1, %c0_i32 : i32, i32, i32
  }
  func.func @transform_3(%arg0: i32, %arg1: i32) -> (i32, i32, i32, i32) {
    %c0_i32 = arith.constant 0 : i32
    %c0_i32_0 = arith.constant 0 : i32
    %c0_i32_1 = arith.constant 0 : i32
    return %arg0, %arg1, %c0_i32, %c0_i32_0 : i32, i32, i32, i32
  }
}

module attributes {stable_mosaic.version = 11 : i64} {
  func.func @_bn_relu_nchw_kernel(%arg0: i32, %arg1: i32, %arg2: memref<1x512x8xbf16, #tpu.memory_space<vmem>>, %arg3: memref<1x8xf32, #tpu.memory_space<vmem>>, %arg4: memref<1x8xf32, #tpu.memory_space<vmem>>, %arg5: memref<1x8x512xf32, #tpu.memory_space<vmem>>) attributes {dimension_semantics = [#tpu.dimension_semantics<parallel>, #tpu.dimension_semantics<parallel>], iteration_bounds = array<i64: 2, 2>, scalar_prefetch = 0 : i64, scratch_operands = 0 : i64, tpu.core_type = #tpu.core_type<tc>, window_params = [{transform_indices = @transform_0, window_bounds = array<i64: 1, 512, 8>}, {pipeline_mode = #tpu.pipeline_mode<synchronous>, transform_indices = @transform_1, window_bounds = array<i64: 1, 8>}, {pipeline_mode = #tpu.pipeline_mode<synchronous>, transform_indices = @transform_2, window_bounds = array<i64: 1, 8>}, {transform_indices = @transform_3, window_bounds = array<i64: 1, 8, 512>}]} {
    %c0 = arith.constant 0 : index
    %c0_0 = arith.constant 0 : index
    %c0_1 = arith.constant 0 : index
    %0 = vector.load %arg2[%c0, %c0_0, %c0_1] : memref<1x512x8xbf16, #tpu.memory_space<vmem>>, vector<1x512x8xbf16>
    %1 = vector.shape_cast %0 : vector<1x512x8xbf16> to vector<512x8xbf16>
    %2 = arith.extf %1 : vector<512x8xbf16> to vector<512x8xf32>
    %c0_2 = arith.constant 0 : index
    %c0_3 = arith.constant 0 : index
    %3 = vector.load %arg3[%c0_2, %c0_3] : memref<1x8xf32, #tpu.memory_space<vmem>>, vector<1x8xf32>
    %4 = vector.broadcast %3 : vector<1x8xf32> to vector<512x8xf32>
    %5 = arith.mulf %2, %4 : vector<512x8xf32>
    %c0_4 = arith.constant 0 : index
    %c0_5 = arith.constant 0 : index
    %6 = vector.load %arg4[%c0_4, %c0_5] : memref<1x8xf32, #tpu.memory_space<vmem>>, vector<1x8xf32>
    %7 = vector.broadcast %6 : vector<1x8xf32> to vector<512x8xf32>
    %8 = arith.addf %5, %7 : vector<512x8xf32>
    %cst = arith.constant 0.000000e+00 : f32
    %9 = vector.broadcast %cst : f32 to vector<512x8xf32>
    %10 = arith.maximumf %8, %9 : vector<512x8xf32>
    %11 = tpu.transpose %10, [1, 0] : vector<512x8xf32> -> vector<8x512xf32>
    %c0_6 = arith.constant 0 : index
    %c0_7 = arith.constant 0 : index
    %c0_8 = arith.constant 0 : index
    %12 = vector.load %arg5[%c0_6, %c0_7, %c0_8] : memref<1x8x512xf32, #tpu.memory_space<vmem>>, vector<1x8x512xf32>
    %13 = vector.shape_cast %12 : vector<1x8x512xf32> to vector<8x512xf32>
    %14 = vector.shape_cast %11 : vector<8x512xf32> to vector<1x8x512xf32>
    tpu.vector_store %arg5[%c0_6, %c0_7, %c0_8], %14 {strides = array<i32>} : memref<1x8x512xf32, #tpu.memory_space<vmem>>, vector<1x8x512xf32>,
    return
  }
  func.func @transform_0(%arg0: i32, %arg1: i32) -> (i32, i32, i32) {
    %c0_i32 = arith.constant 0 : i32
    %c0_i32_0 = arith.constant 0 : i32
    return %arg0, %arg1, %c0_i32 : i32, i32, i32
  }
  func.func @transform_1(%arg0: i32, %arg1: i32) -> (i32, i32) {
    %c0_i32 = arith.constant 0 : i32
    %c0_i32_0 = arith.constant 0 : i32
    %c0_i32_1 = arith.constant 0 : i32
    return %c0_i32, %c0_i32_0 : i32, i32
  }
  func.func @transform_2(%arg0: i32, %arg1: i32) -> (i32, i32) {
    %c0_i32 = arith.constant 0 : i32
    %c0_i32_0 = arith.constant 0 : i32
    %c0_i32_1 = arith.constant 0 : i32
    return %c0_i32, %c0_i32_0 : i32, i32
  }
  func.func @transform_3(%arg0: i32, %arg1: i32) -> (i32, i32, i32) {
    %c0_i32 = arith.constant 0 : i32
    %c0_i32_0 = arith.constant 0 : i32
    return %arg0, %c0_i32, %arg1 : i32, i32, i32
  }
}

</mosaic_0001>

<llo_original>
// kernel: up_conv_forward.3
$region0: #{up_conv_forward.3}
  #allocation0 [shape = 'u32[]', space=smem, size = 0x4, offset = 0x4, fixed_abs, tag = 'smem constant byte address 0x4 - core index']
  #allocation1 [shape = 'u32[144,128]{1,0:T(1,128)}', space=vmem, size = 0x12000, scoped, tag = 'internal scratch']
  %s0 = inlined_call_operand.hbm [shape: bf16[2,1024,8], index: 0, kind: input, shape index: {}]
  %s1 = inlined_call_operand.hbm [shape: f32[1,8], index: 1, kind: input, shape index: {}]
  %s2 = inlined_call_operand.hbm [shape: f32[1,8], index: 2, kind: input, shape index: {}]
  %s3 = inlined_call_operand.hbm [shape: f32[2,8,1024], index: 3, kind: output, shape index: {}]
  %s4 = sld [smem:[#allocation0]]
  $region57: #{up_conv_forward.3} parent=0
    _
  %s6 = ssub.s32 1, %s4
  %s7 = scalar_select 0, %s6, %s4
  $region1: #{up_conv_forward.3} parent=0
    #allocation2 [shape = 'u8[262144]{0}', space=vmem, size = 0x40000, scoped, tag = 'input window, operand 0']
    #allocation3 [shape = 's32[2]{0}', space=sflag, size = 0x8, scoped, tag = 'scoped memory for up_conv_forward.3']
    #allocation4 [shape = 's32[2]{0}', space=sflag, size = 0x8, scoped, tag = 'scoped memory for up_conv_forward.3']
    #allocation5 [shape = 'u8[512]{0}', space=vmem, size = 0x400, scoped, tag = 'input window, operand 1, single buffered']
    #allocation6 [shape = 's32[1]{0}', space=sflag, size = 0x4, scoped, tag = 'scoped memory for up_conv_forward.3']
    #allocation7 [shape = 'u8[512]{0}', space=vmem, size = 0x400, scoped, tag = 'input window, operand 2, single buffered']
    #allocation8 [shape = 'u8[32768]{0}', space=vmem, size = 0x8000, scoped, tag = 'output window, operand 0']
    %8 = vsyncpa [#allocation3], 0
    %s9 = scalar_lea.sflag [#allocation3], 1
    %10 = vsyncpa %s9, 0
    %11 = vsyncpa [#allocation6], 0
    %12 = vsyncpa [#allocation4], 0
    %s13 = scalar_lea.sflag [#allocation4], 1
    %14 = vsyncpa %s13, 0
    loop: start=0, step=1, limit=6
    $region2: #{up_conv_forward.3} parent=1 // loop_pre_header
      _
    $region3: #{up_conv_forward.3} parent=1 // loop_header
      %s16 = sphi 0, %s20
      %p17 = scmp.ge.s32.totalorder %s16, 6
      %s23 = sphi 0, %s35
      %s24 = sphi 0, %s31
      %s25 = sphi 0, %s23
      %s26 = sphi 0, %s24
      %s27 = sphi 0, %s25
      %s28 = sphi 0, %s26
      %s40 = sphi 0, %s42
      %s43 = sphi 0, %s40
      %s44 = sphi 0, %s43
      %s60 = sphi 0, %s44
      %s64 = sphi 0, %s64
      %s66 = sphi 0, %s64
      %s67 = sphi 0, %s66
      %s81 = sphi 0, %s67
      %s85 = sphi 0, %s85
      %s87 = sphi 0, %s85
      %s88 = sphi 0, %s87
      %s102 = sphi 0, %s88
      %s110 = sphi 0, %s112
      %s113 = sphi 0, %s110
      %s114 = sphi 0, %s113
      %s130 = sphi 0, %s114
    $region4: #{up_conv_forward.3} parent=1 // loop_header_branch
      %19 = sbr.rel (%p17) target = $region8
    $region5: #{up_conv_forward.3} parent=1 // loop_body
      %s21 = ssub.s32 %s16, 1
      %s22 = ssub.s32 %s16, 2
      %s29 = sadd.s32 1, %s24
      %p30 = scmp.ge.s32.totalorder %s29, 2
      %s31 = scalar_select %p30, 0, %s29
      %s32 = sadd.s32 1, %s23
      %s33 = scalar_select %p30, %s32, %s23
      %p34 = scmp.ge.s32.totalorder %s33, 2
      %s35 = scalar_select %p34, 0, %s33
      %s36 = ssub.s32 %s23, %s35
      %s37 = ssub.s32 %s24, %s31
      %s38 = sor.u32 %s36, %s37
      %p39 = scmp.eq.s32.totalorder %s38, 0
      %s41 = sadd.s32 %s40, 1
      %s42 = scalar_select %p39, %s40, %s41
      %p45 = pneg %p39
      %p46 = scmp.eq.s32.totalorder %s16, 3
      %p47 = por %p45, %p46
      %p48 = scmp.ne.s32.totalorder %s40, %s43
      %p49 = scmp.eq.s32.totalorder %s16, 0
      %p50 = por %p48, %p49
      %p51 = scmp.ne.s32.totalorder %s40, %s43
      %p52 = scmp.eq.s32.totalorder %s21, 3
      %p53 = por %p51, %p52
      %p54 = scmp.ne.s32.totalorder %s43, %s44
      %p55 = scmp.eq.s32.totalorder %s21, 0
      %p56 = por %p54, %p55
      %p57 = scmp.ne.s32.totalorder %s43, %s44
      %p58 = scmp.eq.s32.totalorder %s22, 3
      %p59 = por %p57, %p58
      %p61 = scmp.ne.s32.totalorder %s44, %s60
      %p62 = scmp.eq.s32.totalorder %s22, 0
      %p63 = por %p61, %p62
      %s65 = sadd.s32 %s64, 1
      %p68 = scmp.eq.s32.totalorder %s16, 3
      %p69 = scmp.ne.s32.totalorder %s64, %s66
      %p70 = scmp.eq.s32.totalorder %s16, 0
      %p71 = por %p69, %p70
      %p72 = scmp.ne.s32.totalorder %s64, %s66
      %p73 = scmp.eq.s32.totalorder %s21, 3
      %p74 = por %p72, %p73
      %p75 = scmp.ne.s32.totalorder %s66, %s67
      %p76 = scmp.eq.s32.totalorder %s21, 0
      %p77 = por %p75, %p76
      %p78 = scmp.ne.s32.totalorder %s66, %s67
      %p79 = scmp.eq.s32.totalorder %s22, 3
      %p80 = por %p78, %p79
      %p82 = scmp.ne.s32.totalorder %s67, %s81
      %p83 = scmp.eq.s32.totalorder %s22, 0
      %p84 = por %p82, %p83
      %s86 = sadd.s32 %s85, 1
      %p89 = scmp.eq.s32.totalorder %s16, 3
      %p90 = scmp.ne.s32.totalorder %s85, %s87
      %p91 = scmp.eq.s32.totalorder %s16, 0
      %p92 = por %p90, %p91
      %p93 = scmp.ne.s32.totalorder %s85, %s87
      %p94 = scmp.eq.s32.totalorder %s21, 3
      %p95 = por %p93, %p94
      %p96 = scmp.ne.s32.totalorder %s87, %s88
      %p97 = scmp.eq.s32.totalorder %s21, 0
      %p98 = por %p96, %p97
      %p99 = scmp.ne.s32.totalorder %s87, %s88
      %p100 = scmp.eq.s32.totalorder %s22, 3
      %p101 = por %p99, %p100
      %p103 = scmp.ne.s32.totalorder %s88, %s102
      %p104 = scmp.eq.s32.totalorder %s22, 0
      %p105 = por %p103, %p104
      %s106 = ssub.s32 %s23, %s35
      %s107 = ssub.s32 %s24, %s31
      %s108 = sor.u32 %s106, %s107
      %p109 = scmp.eq.s32.totalorder %s108, 0
      %s111 = sadd.s32 %s110, 1
      %s112 = scalar_select %p109, %s110, %s111
      %p115 = pneg %p109
      %p116 = scmp.eq.s32.totalorder %s16, 3
      %p117 = por %p115, %p116
      %p118 = scmp.ne.s32.totalorder %s110, %s113
      %p119 = scmp.eq.s32.totalorder %s16, 0
      %p120 = por %p118, %p119
      %p121 = scmp.ne.s32.totalorder %s110, %s113
      %p122 = scmp.eq.s32.totalorder %s21, 3
      %p123 = por %p121, %p122
      %p124 = scmp.ne.s32.totalorder %s113, %s114
      %p125 = scmp.eq.s32.totalorder %s21, 0
      %p126 = por %p124, %p125
      %p127 = scmp.ne.s32.totalorder %s113, %s114
      %p128 = scmp.eq.s32.totalorder %s22, 3
      %p129 = por %p127, %p128
      %p131 = scmp.ne.s32.totalorder %s114, %s130
      %p132 = scmp.eq.s32.totalorder %s22, 0
      %p133 = por %p131, %p132
      %p134 = scmp.le.s32.totalorder 1, %s16
      %p135 = scmp.lt.s32.totalorder %s16, 5
      %p136 = pnand %p134, %p135
      %p137 = pneg %p136
      // Predicated region
      $region9: #{up_conv_forward.3} parent=5 // pred_check
        _
      $region10: #{up_conv_forward.3} parent=5 // pred_check_branch
        %139 = sbr.rel (%p136) target = $region12
      $region11: #{up_conv_forward.3} parent=5 // pred_region
        %s140 = ssub.s32 %s16, 1
        // Predicated region
        $region13: #{up_conv_forward.3} parent=11 // pred_check
          %p141 = pneg %p77
        $region14: #{up_conv_forward.3} parent=11 // pred_check_branch
          %143 = sbr.rel (%p141) target = $region16
        $region15: #{up_conv_forward.3} parent=11 // pred_region
          %s145 = ssub.s32 16, 16
          %146 = vsyncadd [#allocation6], %s145
          %s148 = sshll.u32 [#allocation5], 4
          %s149 = int_to_ptr.vmem [resolvable:$true] %s148
          %151 = dma.hbm_to_vmem [thread:$0]  %s1, 16, %s149, [#allocation6]
        $region16: #{up_conv_forward.3} parent=11 // pred_fallthru
          _
        // Predicated region
        $region17: #{up_conv_forward.3} parent=11 // pred_check
          %p152 = pneg %p98
        $region18: #{up_conv_forward.3} parent=11 // pred_check_branch
          %154 = sbr.rel (%p152) target = $region20
        $region19: #{up_conv_forward.3} parent=11 // pred_region
          %s156 = ssub.s32 16, 16
          %157 = vsyncadd [#allocation6], %s156
          %s159 = sshll.u32 [#allocation7], 4
          %s160 = int_to_ptr.vmem [resolvable:$true] %s159
          %162 = dma.hbm_to_vmem [thread:$0]  %s2, 16, %s160, [#allocation6]
        $region20: #{up_conv_forward.3} parent=11 // pred_fallthru
          _
      $region12: #{up_conv_forward.3} parent=5 // pred_fallthru
        _
      %p163 = scmp.lt.s32.totalorder %s16, 4
      // Predicated region
      $region21: #{up_conv_forward.3} parent=5 // pred_check
        %p164 = pneg %p163
      $region22: #{up_conv_forward.3} parent=5 // pred_check_branch
        %166 = sbr.rel (%p164) target = $region24
      $region23: #{up_conv_forward.3} parent=5 // pred_region
        // Predicated region
        $region25: #{up_conv_forward.3} parent=23 // pred_check
          %p167 = pneg %p50
        $region26: #{up_conv_forward.3} parent=23 // pred_check_branch
          %169 = sbr.rel (%p167) target = $region28
        $region27: #{up_conv_forward.3} parent=23 // pred_region
          %s170 = sand.u32 %s40, 1
          %s171 = scalar_lea.sflag [#allocation3], %s170
          %s172 = sand.u32 %s40, 1
          %s173 = smul.addr %s172, 256
          %s174 = scalar_lea.vmem [#allocation2], %s173
          %s175 = smul.u32 64, %s24
          %s177 = ssub.s32 4096, 4096
          %178 = vsyncadd %s171, %s177
          %s179 = smul.addr %s23, 128
          %s180 = sadd.s32 %s175, %s179
          %s181 = smul.addr %s180, 64
          %s182 = scalar_lea.hbm %s0, %s181
          %s183 = sshll.u32 %s174, 4
          %s184 = int_to_ptr.vmem [resolvable:$true] %s183
          %189 = dma.hbm_to_vmem [thread:$0]  %s182, 4096, %s184, %s171, 64, 64, 4
        $region28: #{up_conv_forward.3} parent=23 // pred_fallthru
          _
      $region24: #{up_conv_forward.3} parent=5 // pred_fallthru
        _
      %p190 = scmp.le.s32.totalorder 1, %s16
      %p191 = scmp.lt.s32.totalorder %s16, 5
      %p192 = pnand %p190, %p191
      %p193 = pneg %p192
      // Predicated region
      $region29: #{up_conv_forward.3} parent=5 // pred_check
        _
      $region30: #{up_conv_forward.3} parent=5 // pred_check_branch
        %195 = sbr.rel (%p192) target = $region32
      $region31: #{up_conv_forward.3} parent=5 // pred_region
        %s196 = ssub.s32 %s16, 1
        %s197 = sand.u32 %s43, 1
        %s198 = scalar_lea.sflag [#allocation3], %s197
        %s199 = sand.u32 %s43, 1
        %s200 = smul.addr %s199, 256
        %s201 = scalar_lea.vmem [#allocation2], %s200
        // Predicated region
        $region33: #{up_conv_forward.3} parent=31 // pred_check
          %p202 = pneg %p56
        $region34: #{up_conv_forward.3} parent=31 // pred_check_branch
          %204 = sbr.rel (%p202) target = $region36
        $region35: #{up_conv_forward.3} parent=31 // pred_region
          %205 = dma.done %s198, 4096
        $region36: #{up_conv_forward.3} parent=31 // pred_fallthru
          _
        // Predicated region
        $region37: #{up_conv_forward.3} parent=31 // pred_check
          %p206 = pneg %p77
        $region38: #{up_conv_forward.3} parent=31 // pred_check_branch
          %208 = sbr.rel (%p206) target = $region40
        $region39: #{up_conv_forward.3} parent=31 // pred_region
          %209 = dma.done [#allocation6], 16
        $region40: #{up_conv_forward.3} parent=31 // pred_fallthru
          _
        // Predicated region
        $region41: #{up_conv_forward.3} parent=31 // pred_check
          %p210 = pneg %p98
        $region42: #{up_conv_forward.3} parent=31 // pred_check_branch
          %212 = sbr.rel (%p210) target = $region44
        $region43: #{up_conv_forward.3} parent=31 // pred_region
          %213 = dma.done [#allocation6], 16
        $region44: #{up_conv_forward.3} parent=31 // pred_fallthru
          _
        %s214 = sand.u32 %s43, 1
        %s215 = scalar_lea.sflag [#allocation3], %s214
        %s216 = sand.u32 %s43, 1
        %s217 = smul.addr %s216, 256
        %s218 = scalar_lea.vmem [#allocation2], %s217
        %p219 = pneg %p56
        %p220 = pneg %p53
        %p221 = pneg %p77
        %p222 = pneg %p74
        %p223 = pneg %p98
        %p224 = pneg %p95
        %p225 = pneg %p126
        %p226 = pneg %p123
        %s227 = sand.u32 %s113, 1
        %s228 = scalar_lea.sflag [#allocation4], %s227
        %s229 = sand.u32 %s113, 1
        %s230 = smul.addr %s229, 32
        %s231 = scalar_lea.vmem [#allocation8], %s230
        %s232 = smul.u32 64, %s26
        %s233 = smul.u32 4, %s26
        %v234 = vld [vmem:[%s201] sm:$0xf]
        %v235 = vld [vmem:[%s201 + $0x4] sm:$0xf]
        %v236 = vld [vmem:[%s201 + $0x8] sm:$0xf]
        %v237 = vld [vmem:[%s201 + $0xc] sm:$0xf]
        %v238 = vld [vmem:[%s201 + $0x10] sm:$0xf]
        %v239 = vld [vmem:[%s201 + $0x14] sm:$0xf]
        %v240 = vld [vmem:[%s201 + $0x18] sm:$0xf]
        %v241 = vld [vmem:[%s201 + $0x1c] sm:$0xf]
        %v242 = vld [vmem:[%s201 + $0x20] sm:$0xf]
        %v243 = vld [vmem:[%s201 + $0x24] sm:$0xf]
        %v244 = vld [vmem:[%s201 + $0x28] sm:$0xf]
        %v245 = vld [vmem:[%s201 + $0x2c] sm:$0xf]
        %v246 = vld [vmem:[%s201 + $0x30] sm:$0xf]
        %v247 = vld [vmem:[%s201 + $0x34] sm:$0xf]
        %v248 = vld [vmem:[%s201 + $0x38] sm:$0xf]
        %v249 = vld [vmem:[%s201 + $0x3c] sm:$0xf]
        %v250 = vld [vmem:[%s201 + $0x40] sm:$0xf]
        %v251 = vld [vmem:[%s201 + $0x44] sm:$0xf]
        %v252 = vld [vmem:[%s201 + $0x48] sm:$0xf]
        %v253 = vld [vmem:[%s201 + $0x4c] sm:$0xf]
        %v254 = vld [vmem:[%s201 + $0x50] sm:$0xf]
        %v255 = vld [vmem:[%s201 + $0x54] sm:$0xf]
        %v256 = vld [vmem:[%s201 + $0x58] sm:$0xf]
        %v257 = vld [vmem:[%s201 + $0x5c] sm:$0xf]
        %v258 = vld [vmem:[%s201 + $0x60] sm:$0xf]
        %v259 = vld [vmem:[%s201 + $0x64] sm:$0xf]
        %v260 = vld [vmem:[%s201 + $0x68] sm:$0xf]
        %v261 = vld [vmem:[%s201 + $0x6c] sm:$0xf]
        %v262 = vld [vmem:[%s201 + $0x70] sm:$0xf]
        %v263 = vld [vmem:[%s201 + $0x74] sm:$0xf]
        %v264 = vld [vmem:[%s201 + $0x78] sm:$0xf]
        %v265 = vld [vmem:[%s201 + $0x7c] sm:$0xf]
        %v266 = vld [vmem:[%s201 + $0x80] sm:$0xf]
        %v267 = vld [vmem:[%s201 + $0x84] sm:$0xf]
        %v268 = vld [vmem:[%s201 + $0x88] sm:$0xf]
        %v269 = vld [vmem:[%s201 + $0x8c] sm:$0xf]
        %v270 = vld [vmem:[%s201 + $0x90] sm:$0xf]
        %v271 = vld [vmem:[%s201 + $0x94] sm:$0xf]
        %v272 = vld [vmem:[%s201 + $0x98] sm:$0xf]
        %v273 = vld [vmem:[%s201 + $0x9c] sm:$0xf]
        %v274 = vld [vmem:[%s201 + $0xa0] sm:$0xf]
        %v275 = vld [vmem:[%s201 + $0xa4] sm:$0xf]
        %v276 = vld [vmem:[%s201 + $0xa8] sm:$0xf]
        %v277 = vld [vmem:[%s201 + $0xac] sm:$0xf]
        %v278 = vld [vmem:[%s201 + $0xb0] sm:$0xf]
        %v279 = vld [vmem:[%s201 + $0xb4] sm:$0xf]
        %v280 = vld [vmem:[%s201 + $0xb8] sm:$0xf]
        %v281 = vld [vmem:[%s201 + $0xbc] sm:$0xf]
        %v282 = vld [vmem:[%s201 + $0xc0] sm:$0xf]
        %v283 = vld [vmem:[%s201 + $0xc4] sm:$0xf]
        %v284 = vld [vmem:[%s201 + $0xc8] sm:$0xf]
        %v285 = vld [vmem:[%s201 + $0xcc] sm:$0xf]
        %v286 = vld [vmem:[%s201 + $0xd0] sm:$0xf]
        %v287 = vld [vmem:[%s201 + $0xd4] sm:$0xf]
        %v288 = vld [vmem:[%s201 + $0xd8] sm:$0xf]
        %v289 = vld [vmem:[%s201 + $0xdc] sm:$0xf]
        %v290 = vld [vmem:[%s201 + $0xe0] sm:$0xf]
        %v291 = vld [vmem:[%s201 + $0xe4] sm:$0xf]
        %v292 = vld [vmem:[%s201 + $0xe8] sm:$0xf]
        %v293 = vld [vmem:[%s201 + $0xec] sm:$0xf]
        %v294 = vld [vmem:[%s201 + $0xf0] sm:$0xf]
        %v295 = vld [vmem:[%s201 + $0xf4] sm:$0xf]
        %v296 = vld [vmem:[%s201 + $0xf8] sm:$0xf]
        %v297 = vld [vmem:[%s201 + $0xfc] sm:$0xf]
        %v298 = vunpack.c.l.bf16 %v234
        %v299 = vunpack.c.l.bf16 %v235
        %v300 = vunpack.c.l.bf16 %v236
        %v301 = vunpack.c.l.bf16 %v237
        %v302 = vunpack.c.l.bf16 %v238
        %v303 = vunpack.c.l.bf16 %v239
        %v304 = vunpack.c.l.bf16 %v240
        %v305 = vunpack.c.l.bf16 %v241
        %v306 = vunpack.c.l.bf16 %v242
        %v307 = vunpack.c.l.bf16 %v243
        %v308 = vunpack.c.l.bf16 %v244
        %v309 = vunpack.c.l.bf16 %v245
        %v310 = vunpack.c.l.bf16 %v246
        %v311 = vunpack.c.l.bf16 %v247
        %v312 = vunpack.c.l.bf16 %v248
        %v313 = vunpack.c.l.bf16 %v249
        %v314 = vunpack.c.l.bf16 %v250
        %v315 = vunpack.c.l.bf16 %v251
        %v316 = vunpack.c.l.bf16 %v252
        %v317 = vunpack.c.l.bf16 %v253
        %v318 = vunpack.c.l.bf16 %v254
        %v319 = vunpack.c.l.bf16 %v255
        %v320 = vunpack.c.l.bf16 %v256
        %v321 = vunpack.c.l.bf16 %v257
        %v322 = vunpack.c.l.bf16 %v258
        %v323 = vunpack.c.l.bf16 %v259
        %v324 = vunpack.c.l.bf16 %v260
        %v325 = vunpack.c.l.bf16 %v261
        %v326 = vunpack.c.l.bf16 %v262
        %v327 = vunpack.c.l.bf16 %v263
        %v328 = vunpack.c.l.bf16 %v264
        %v329 = vunpack.c.l.bf16 %v265
        %v330 = vunpack.c.l.bf16 %v266
        %v331 = vunpack.c.l.bf16 %v267
        %v332 = vunpack.c.l.bf16 %v268
        %v333 = vunpack.c.l.bf16 %v269
        %v334 = vunpack.c.l.bf16 %v270
        %v335 = vunpack.c.l.bf16 %v271
        %v336 = vunpack.c.l.bf16 %v272
        %v337 = vunpack.c.l.bf16 %v273
        %v338 = vunpack.c.l.bf16 %v274
        %v339 = vunpack.c.l.bf16 %v275
        %v340 = vunpack.c.l.bf16 %v276
        %v341 = vunpack.c.l.bf16 %v277
        %v342 = vunpack.c.l.bf16 %v278
        %v343 = vunpack.c.l.bf16 %v279
        %v344 = vunpack.c.l.bf16 %v280
        %v345 = vunpack.c.l.bf16 %v281
        %v346 = vunpack.c.l.bf16 %v282
        %v347 = vunpack.c.l.bf16 %v283
        %v348 = vunpack.c.l.bf16 %v284
        %v349 = vunpack.c.l.bf16 %v285
        %v350 = vunpack.c.l.bf16 %v286
        %v351 = vunpack.c.l.bf16 %v287
        %v352 = vunpack.c.l.bf16 %v288
        %v353 = vunpack.c.l.bf16 %v289
        %v354 = vunpack.c.l.bf16 %v290
        %v355 = vunpack.c.l.bf16 %v291
        %v356 = vunpack.c.l.bf16 %v292
        %v357 = vunpack.c.l.bf16 %v293
        %v358 = vunpack.c.l.bf16 %v294
        %v359 = vunpack.c.l.bf16 %v295
        %v360 = vunpack.c.l.bf16 %v296
        %v361 = vunpack.c.l.bf16 %v297
        %v362 = vld [vmem:[#allocation5] sm:$0x1]
        %v364 = vlaneseq
        %v365 = vshrl.u32 %v364, 7
        %v366 = vsub.s32 0, %v365
        %v367 = vrot.slane %v362, %v366
        %v369 = vmul.f32 %v298, %v367
        %v370 = vmul.f32 %v299, %v367
        %v371 = vmul.f32 %v300, %v367
        %v372 = vmul.f32 %v301, %v367
        %v373 = vmul.f32 %v302, %v367
        %v374 = vmul.f32 %v303, %v367
        %v375 = vmul.f32 %v304, %v367
        %v376 = vmul.f32 %v305, %v367
        %v377 = vmul.f32 %v306, %v367
        %v378 = vmul.f32 %v307, %v367
        %v379 = vmul.f32 %v308, %v367
        %v380 = vmul.f32 %v309, %v367
        %v381 = vmul.f32 %v310, %v367
        %v382 = vmul.f32 %v311, %v367
        %v383 = vmul.f32 %v312, %v367
        %v384 = vmul.f32 %v313, %v367
        %v385 = vmul.f32 %v314, %v367
        %v386 = vmul.f32 %v315, %v367
        %v387 = vmul.f32 %v316, %v367
        %v388 = vmul.f32 %v317, %v367
        %v389 = vmul.f32 %v318, %v367
        %v390 = vmul.f32 %v319, %v367
        %v391 = vmul.f32 %v320, %v367
        %v392 = vmul.f32 %v321, %v367
        %v393 = vmul.f32 %v322, %v367
        %v394 = vmul.f32 %v323, %v367
        %v395 = vmul.f32 %v324, %v367
        %v396 = vmul.f32 %v325, %v367
        %v397 = vmul.f32 %v326, %v367
        %v398 = vmul.f32 %v327, %v367
        %v399 = vmul.f32 %v328, %v367
        %v400 = vmul.f32 %v329, %v367
        %v401 = vmul.f32 %v330, %v367
        %v402 = vmul.f32 %v331, %v367
        %v403 = vmul.f32 %v332, %v367
        %v404 = vmul.f32 %v333, %v367
        %v405 = vmul.f32 %v334, %v367
        %v406 = vmul.f32 %v335, %v367
        %v407 = vmul.f32 %v336, %v367
        %v408 = vmul.f32 %v337, %v367
        %v409 = vmul.f32 %v338, %v367
        %v410 = vmul.f32 %v339, %v367
        %v411 = vmul.f32 %v340, %v367
        %v412 = vmul.f32 %v341, %v367
        %v413 = vmul.f32 %v342, %v367
        %v414 = vmul.f32 %v343, %v367
        %v415 = vmul.f32 %v344, %v367
        %v416 = vmul.f32 %v345, %v367
        %v417 = vmul.f32 %v346, %v367
        %v418 = vmul.f32 %v347, %v367
        %v419 = vmul.f32 %v348, %v367
        %v420 = vmul.f32 %v349, %v367
        %v421 = vmul.f32 %v350, %v367
        %v422 = vmul.f32 %v351, %v367
        %v423 = vmul.f32 %v352, %v367
        %v424 = vmul.f32 %v353, %v367
        %v425 = vmul.f32 %v354, %v367
        %v426 = vmul.f32 %v355, %v367
        %v427 = vmul.f32 %v356, %v367
        %v428 = vmul.f32 %v357, %v367
        %v429 = vmul.f32 %v358, %v367
        %v430 = vmul.f32 %v359, %v367
        %v431 = vmul.f32 %v360, %v367
        %v432 = vmul.f32 %v361, %v367
        %v433 = vld [vmem:[#allocation7] sm:$0x1]
        %v435 = vlaneseq
        %v436 = vshrl.u32 %v435, 7
        %v437 = vsub.s32 0, %v436
        %v438 = vrot.slane %v433, %v437
        %v440 = vadd.f32 %v369, %v438
        %v441 = vadd.f32 %v370, %v438
        %v442 = vadd.f32 %v371, %v438
        %v443 = vadd.f32 %v372, %v438
        %v444 = vadd.f32 %v373, %v438
        %v445 = vadd.f32 %v374, %v438
        %v446 = vadd.f32 %v375, %v438
        %v447 = vadd.f32 %v376, %v438
        %v448 = vadd.f32 %v377, %v438
        %v449 = vadd.f32 %v378, %v438
        %v450 = vadd.f32 %v379, %v438
        %v451 = vadd.f32 %v380, %v438
        %v452 = vadd.f32 %v381, %v438
        %v453 = vadd.f32 %v382, %v438
        %v454 = vadd.f32 %v383, %v438
        %v455 = vadd.f32 %v384, %v438
        %v456 = vadd.f32 %v385, %v438
        %v457 = vadd.f32 %v386, %v438
        %v458 = vadd.f32 %v387, %v438
        %v459 = vadd.f32 %v388, %v438
        %v460 = vadd.f32 %v389, %v438
        %v461 = vadd.f32 %v390, %v438
        %v462 = vadd.f32 %v391, %v438
        %v463 = vadd.f32 %v392, %v438
        %v464 = vadd.f32 %v393, %v438
        %v465 = vadd.f32 %v394, %v438
        %v466 = vadd.f32 %v395, %v438
        %v467 = vadd.f32 %v396, %v438
        %v468 = vadd.f32 %v397, %v438
        %v469 = vadd.f32 %v398, %v438
        %v470 = vadd.f32 %v399, %v438
        %v471 = vadd.f32 %v400, %v438
        %v472 = vadd.f32 %v401, %v438
        %v473 = vadd.f32 %v402, %v438
        %v474 = vadd.f32 %v403, %v438
        %v475 = vadd.f32 %v404, %v438
        %v476 = vadd.f32 %v405, %v438
        %v477 = vadd.f32 %v406, %v438
        %v478 = vadd.f32 %v407, %v438
        %v479 = vadd.f32 %v408, %v438
        %v480 = vadd.f32 %v409, %v438
        %v481 = vadd.f32 %v410, %v438
        %v482 = vadd.f32 %v411, %v438
        %v483 = vadd.f32 %v412, %v438
        %v484 = vadd.f32 %v413, %v438
        %v485 = vadd.f32 %v414, %v438
        %v486 = vadd.f32 %v415, %v438
        %v487 = vadd.f32 %v416, %v438
        %v488 = vadd.f32 %v417, %v438
        %v489 = vadd.f32 %v418, %v438
        %v490 = vadd.f32 %v419, %v438
        %v491 = vadd.f32 %v420, %v438
        %v492 = vadd.f32 %v421, %v438
        %v493 = vadd.f32 %v422, %v438
        %v494 = vadd.f32 %v423, %v438
        %v495 = vadd.f32 %v424, %v438
        %v496 = vadd.f32 %v425, %v438
        %v497 = vadd.f32 %v426, %v438
        %v498 = vadd.f32 %v427, %v438
        %v499 = vadd.f32 %v428, %v438
        %v500 = vadd.f32 %v429, %v438
        %v501 = vadd.f32 %v430, %v438
        %v502 = vadd.f32 %v431, %v438
        %v503 = vadd.f32 %v432, %v438
        %v504 = vmax.f32 %v440, 0.0
        %v505 = vmax.f32 %v441, 0.0
        %v506 = vmax.f32 %v442, 0.0
        %v507 = vmax.f32 %v443, 0.0
        %v508 = vmax.f32 %v444, 0.0
        %v509 = vmax.f32 %v445, 0.0
        %v510 = vmax.f32 %v446, 0.0
        %v511 = vmax.f32 %v447, 0.0
        %v512 = vmax.f32 %v448, 0.0
        %v513 = vmax.f32 %v449, 0.0
        %v514 = vmax.f32 %v450, 0.0
        %v515 = vmax.f32 %v451, 0.0
        %v516 = vmax.f32 %v452, 0.0
        %v517 = vmax.f32 %v453, 0.0
        %v518 = vmax.f32 %v454, 0.0
        %v519 = vmax.f32 %v455, 0.0
        %v520 = vmax.f32 %v456, 0.0
        %v521 = vmax.f32 %v457, 0.0
        %v522 = vmax.f32 %v458, 0.0
        %v523 = vmax.f32 %v459, 0.0
        %v524 = vmax.f32 %v460, 0.0
        %v525 = vmax.f32 %v461, 0.0
        %v526 = vmax.f32 %v462, 0.0
        %v527 = vmax.f32 %v463, 0.0
        %v528 = vmax.f32 %v464, 0.0
        %v529 = vmax.f32 %v465, 0.0
        %v530 = vmax.f32 %v466, 0.0
        %v531 = vmax.f32 %v467, 0.0
        %v532 = vmax.f32 %v468, 0.0
        %v533 = vmax.f32 %v469, 0.0
        %v534 = vmax.f32 %v470, 0.0
        %v535 = vmax.f32 %v471, 0.0
        %v536 = vmax.f32 %v472, 0.0
        %v537 = vmax.f32 %v473, 0.0
        %v538 = vmax.f32 %v474, 0.0
        %v539 = vmax.f32 %v475, 0.0
        %v540 = vmax.f32 %v476, 0.0
        %v541 = vmax.f32 %v477, 0.0
        %v542 = vmax.f32 %v478, 0.0
        %v543 = vmax.f32 %v479, 0.0
        %v544 = vmax.f32 %v480, 0.0
        %v545 = vmax.f32 %v481, 0.0
        %v546 = vmax.f32 %v482, 0.0
        %v547 = vmax.f32 %v483, 0.0
        %v548 = vmax.f32 %v484, 0.0
        %v549 = vmax.f32 %v485, 0.0
        %v550 = vmax.f32 %v486, 0.0
        %v551 = vmax.f32 %v487, 0.0
        %v552 = vmax.f32 %v488, 0.0
        %v553 = vmax.f32 %v489, 0.0
        %v554 = vmax.f32 %v490, 0.0
        %v555 = vmax.f32 %v491, 0.0
        %v556 = vmax.f32 %v492, 0.0
        %v557 = vmax.f32 %v493, 0.0
        %v558 = vmax.f32 %v494, 0.0
        %v559 = vmax.f32 %v495, 0.0
        %v560 = vmax.f32 %v496, 0.0
        %v561 = vmax.f32 %v497, 0.0
        %v562 = vmax.f32 %v498, 0.0
        %v563 = vmax.f32 %v499, 0.0
        %v564 = vmax.f32 %v500, 0.0
        %v565 = vmax.f32 %v501, 0.0
        %v566 = vmax.f32 %v502, 0.0
        %v567 = vmax.f32 %v503, 0.0
        %568 = vxpose.xlu0.b32.start [1/16] %v504, 128
        %569 = vxpose.xlu0.b32.cont [2/16] %v505, 128
        %570 = vxpose.xlu0.b32.cont [3/16] %v506, 128
        %571 = vxpose.xlu0.b32.cont [4/16] %v507, 128
        %572 = vxpose.xlu0.b32.cont [5/16] %v508, 128
        %573 = vxpose.xlu0.b32.cont [6/16] %v509, 128
        %574 = vxpose.xlu0.b32.cont [7/16] %v510, 128
        %575 = vxpose.xlu0.b32.cont [8/16] %v511, 128
        %576 = vxpose.xlu0.b32.cont [9/16] %v512, 128
        %577 = vxpose.xlu0.b32.cont [10/16] %v513, 128
        %578 = vxpose.xlu0.b32.cont [11/16] %v514, 128
        %579 = vxpose.xlu0.b32.cont [12/16] %v515, 128
        %580 = vxpose.xlu0.b32.cont [13/16] %v516, 128
        %581 = vxpose.xlu0.b32.cont [14/16] %v517, 128
        %582 = vxpose.xlu0.b32.cont [15/16] %v518, 128
        %583 = vxpose.xlu0.b32.end [16/16] %v519, 128
        %v584 = vpop.trf.xlu0
        %v585 = vpop.trf.xlu0
        %v586 = vpop.trf.xlu0
        %v587 = vpop.trf.xlu0
        %v588 = vpop.trf.xlu0
        %v589 = vpop.trf.xlu0
        %v590 = vpop.trf.xlu0
        %v591 = vpop.trf.xlu0
        %v592 = vpop.trf.xlu0
        %v593 = vpop.trf.xlu0
        %v594 = vpop.trf.xlu0
        %v595 = vpop.trf.xlu0
        %v596 = vpop.trf.xlu0
        %v597 = vpop.trf.xlu0
        %v598 = vpop.trf.xlu0
        %v599 = vpop.trf.xlu0
        %600 = vxpose.xlu0.b32.start [1/16] %v520, 128
        %601 = vxpose.xlu0.b32.cont [2/16] %v521, 128
        %602 = vxpose.xlu0.b32.cont [3/16] %v522, 128
        %603 = vxpose.xlu0.b32.cont [4/16] %v523, 128
        %604 = vxpose.xlu0.b32.cont [5/16] %v524, 128
        %605 = vxpose.xlu0.b32.cont [6/16] %v525, 128
        %606 = vxpose.xlu0.b32.cont [7/16] %v526, 128
        %607 = vxpose.xlu0.b32.cont [8/16] %v527, 128
        %608 = vxpose.xlu0.b32.cont [9/16] %v528, 128
        %609 = vxpose.xlu0.b32.cont [10/16] %v529, 128
        %610 = vxpose.xlu0.b32.cont [11/16] %v530, 128
        %611 = vxpose.xlu0.b32.cont [12/16] %v531, 128
        %612 = vxpose.xlu0.b32.cont [13/16] %v532, 128
        %613 = vxpose.xlu0.b32.cont [14/16] %v533, 128
        %614 = vxpose.xlu0.b32.cont [15/16] %v534, 128
        %615 = vxpose.xlu0.b32.end [16/16] %v535, 128
        %v616 = vpop.trf.xlu0
        %v617 = vpop.trf.xlu0
        %v618 = vpop.trf.xlu0
        %v619 = vpop.trf.xlu0
        %v620 = vpop.trf.xlu0
        %v621 = vpop.trf.xlu0
        %v622 = vpop.trf.xlu0
        %v623 = vpop.trf.xlu0
        %v624 = vpop.trf.xlu0
        %v625 = vpop.trf.xlu0
        %v626 = vpop.trf.xlu0
        %v627 = vpop.trf.xlu0
        %v628 = vpop.trf.xlu0
        %v629 = vpop.trf.xlu0
        %v630 = vpop.trf.xlu0
        %v631 = vpop.trf.xlu0
        %632 = vxpose.xlu0.b32.start [1/16] %v536, 128
        %633 = vxpose.xlu0.b32.cont [2/16] %v537, 128
        %634 = vxpose.xlu0.b32.cont [3/16] %v538, 128
        %635 = vxpose.xlu0.b32.cont [4/16] %v539, 128
        %636 = vxpose.xlu0.b32.cont [5/16] %v540, 128
        %637 = vxpose.xlu0.b32.cont [6/16] %v541, 128
        %638 = vxpose.xlu0.b32.cont [7/16] %v542, 128
        %639 = vxpose.xlu0.b32.cont [8/16] %v543, 128
        %640 = vxpose.xlu0.b32.cont [9/16] %v544, 128
        %641 = vxpose.xlu0.b32.cont [10/16] %v545, 128
        %642 = vxpose.xlu0.b32.cont [11/16] %v546, 128
        %643 = vxpose.xlu0.b32.cont [12/16] %v547, 128
        %644 = vxpose.xlu0.b32.cont [13/16] %v548, 128
        %645 = vxpose.xlu0.b32.cont [14/16] %v549, 128
        %646 = vxpose.xlu0.b32.cont [15/16] %v550, 128
        %647 = vxpose.xlu0.b32.end [16/16] %v551, 128
        %v648 = vpop.trf.xlu0
        %v649 = vpop.trf.xlu0
        %v650 = vpop.trf.xlu0
        %v651 = vpop.trf.xlu0
        %v652 = vpop.trf.xlu0
        %v653 = vpop.trf.xlu0
        %v654 = vpop.trf.xlu0
        %v655 = vpop.trf.xlu0
        %v656 = vpop.trf.xlu0
        %v657 = vpop.trf.xlu0
        %v658 = vpop.trf.xlu0
        %v659 = vpop.trf.xlu0
        %v660 = vpop.trf.xlu0
        %v661 = vpop.trf.xlu0
        %v662 = vpop.trf.xlu0
        %v663 = vpop.trf.xlu0
        %664 = vxpose.xlu0.b32.start [1/16] %v552, 128
        %665 = vxpose.xlu0.b32.cont [2/16] %v553, 128
        %666 = vxpose.xlu0.b32.cont [3/16] %v554, 128
        %667 = vxpose.xlu0.b32.cont [4/16] %v555, 128
        %668 = vxpose.xlu0.b32.cont [5/16] %v556, 128
        %669 = vxpose.xlu0.b32.cont [6/16] %v557, 128
        %670 = vxpose.xlu0.b32.cont [7/16] %v558, 128
        %671 = vxpose.xlu0.b32.cont [8/16] %v559, 128
        %672 = vxpose.xlu0.b32.cont [9/16] %v560, 128
        %673 = vxpose.xlu0.b32.cont [10/16] %v561, 128
        %674 = vxpose.xlu0.b32.cont [11/16] %v562, 128
        %675 = vxpose.xlu0.b32.cont [12/16] %v563, 128
        %676 = vxpose.xlu0.b32.cont [13/16] %v564, 128
        %677 = vxpose.xlu0.b32.cont [14/16] %v565, 128
        %678 = vxpose.xlu0.b32.cont [15/16] %v566, 128
        %679 = vxpose.xlu0.b32.end [16/16] %v567, 128
        %v680 = vpop.trf.xlu0
        %v681 = vpop.trf.xlu0
        %v682 = vpop.trf.xlu0
        %v683 = vpop.trf.xlu0
        %v684 = vpop.trf.xlu0
        %v685 = vpop.trf.xlu0
        %v686 = vpop.trf.xlu0
        %v687 = vpop.trf.xlu0
        %v688 = vpop.trf.xlu0
        %v689 = vpop.trf.xlu0
        %v690 = vpop.trf.xlu0
        %v691 = vpop.trf.xlu0
        %v692 = vpop.trf.xlu0
        %v693 = vpop.trf.xlu0
        %v694 = vpop.trf.xlu0
        %v695 = vpop.trf.xlu0
        %696 = vst [vmem:[%s231] sm:$0xff] %v584
        %697 = vst [vmem:[%s231 + $0x8] sm:$0xff] %v616
        %698 = vst [vmem:[%s231 + $0x10] sm:$0xff] %v648
        %699 = vst [vmem:[%s231 + $0x18] sm:$0xff] %v680
        %s700 = sand.u32 %s113, 1
        %s701 = scalar_lea.sflag [#allocation4], %s700
        %s702 = sand.u32 %s113, 1
        %s703 = smul.addr %s702, 32
        %s704 = scalar_lea.vmem [#allocation8], %s703
        // Predicated region
        $region45: #{up_conv_forward.3} parent=31 // pred_check
          %p705 = pneg %p123
        $region46: #{up_conv_forward.3} parent=31 // pred_check_branch
          %707 = sbr.rel (%p705) target = $region48
        $region47: #{up_conv_forward.3} parent=31 // pred_region
          %s708 = smul.u32 4, %s26
          %s710 = ssub.s32 512, 512
          %711 = vsyncadd %s701, %s710
          %s712 = smul.addr %s25, 8
          %s713 = sadd.s32 %s708, %s712
          %s714 = smul.addr %s713, 128
          %s715 = scalar_lea.hbm %s3, %s714
          %s717 = sshll.u32 %s704, 4
          %s718 = int_to_ptr.vmem [resolvable:$true] %s717
          %720 = dma.vmem_to_hbm [thread:$0]  %s718, 512, %s715, %s701
        $region48: #{up_conv_forward.3} parent=31 // pred_fallthru
          _
      $region32: #{up_conv_forward.3} parent=5 // pred_fallthru
        _
      %p721 = scmp.le.s32.totalorder 2, %s16
      // Predicated region
      $region49: #{up_conv_forward.3} parent=5 // pred_check
        %p722 = pneg %p721
      $region50: #{up_conv_forward.3} parent=5 // pred_check_branch
        %724 = sbr.rel (%p722) target = $region52
      $region51: #{up_conv_forward.3} parent=5 // pred_region
        %s725 = ssub.s32 %s16, 2
        // Predicated region
        $region53: #{up_conv_forward.3} parent=51 // pred_check
          %p726 = pneg %p129
        $region54: #{up_conv_forward.3} parent=51 // pred_check_branch
          %728 = sbr.rel (%p726) target = $region56
        $region55: #{up_conv_forward.3} parent=51 // pred_region
          %s729 = sand.u32 %s114, 1
          %s730 = scalar_lea.sflag [#allocation4], %s729
          %s731 = sand.u32 %s114, 1
          %s732 = smul.addr %s731, 32
          %s733 = scalar_lea.vmem [#allocation8], %s732
          %734 = dma.done %s730, 512
        $region56: #{up_conv_forward.3} parent=51 // pred_fallthru
          _
      $region52: #{up_conv_forward.3} parent=5 // pred_fallthru
        _
    $region6: #{up_conv_forward.3} parent=1 // loop_footer
      %s20 = sadd.s32 1, %s16
    $region7: #{up_conv_forward.3} parent=1 // loop_footer_branch
      %15 = sbr.rel target = $region3
    $region8: #{up_conv_forward.3} parent=1 // loop_exit
      _
    %735 = vsyncpa [#allocation3], 1
    %s736 = scalar_lea.sflag [#allocation3], 1
    %737 = vsyncpa %s736, 1
    %738 = vsyncpa [#allocation6], 1
    %739 = vsyncpa [#allocation4], 1
    %s740 = scalar_lea.sflag [#allocation4], 1
    %741 = vsyncpa %s740, 1

// kernel: up_conv_forward.2
$region0: #{up_conv_forward.2}
  #allocation0 [shape = 'u32[]', space=smem, size = 0x4, offset = 0x4, fixed_abs, tag = 'smem constant byte address 0x4 - core index']
  #allocation1 [shape = 'u32[144,128]{1,0:T(1,128)}', space=vmem, size = 0x12000, scoped, tag = 'internal scratch']
  %s0 = inlined_call_operand.hbm [shape: bf16[2,2,10,34,4], index: 0, kind: input, shape index: {}]
  %s1 = inlined_call_operand.hbm [shape: bf16[36,8], index: 1, kind: input, shape index: {}]
  %s2 = inlined_call_operand.hbm [shape: bf16[2,1024,8], index: 2, kind: output, shape index: {0}]
  %s3 = inlined_call_operand.hbm [shape: f32[2,2,2,8], index: 3, kind: output, shape index: {1}]
  %4 = xla_tuple %s2, %s3
  %s5 = sld [smem:[#allocation0]]
  $region57: #{up_conv_forward.2} parent=0
    _
  %s7 = ssub.s32 1, %s5
  %s8 = scalar_select 0, %s7, %s5
  $region1: #{up_conv_forward.2} parent=0
    #allocation2 [shape = 'u8[204800]{0}', space=vmem, size = 0x32000, scoped, tag = 'input window, operand 0']
    #allocation3 [shape = 's32[2]{0}', space=sflag, size = 0x8, scoped, tag = 'scoped memory for up_conv_forward.2']
    #allocation4 [shape = 's32[2]{0}', space=sflag, size = 0x8, scoped, tag = 'scoped memory for up_conv_forward.2']
    #allocation5 [shape = 'u8[10240]{0}', space=vmem, size = 0x2800, scoped, tag = 'input window, operand 1, single buffered']
    #allocation6 [shape = 's32[1]{0}', space=sflag, size = 0x4, scoped, tag = 'scoped memory for up_conv_forward.2']
    #allocation7 [shape = 'u8[262144]{0}', space=vmem, size = 0x40000, scoped, tag = 'output window, operand 0']
    #allocation8 [shape = 'u8[2048]{0}', space=vmem, size = 0x800, scoped, tag = 'output window, operand 1']
    #allocation9 [shape = 's32[2]{0}', space=sflag, size = 0x8, scoped, tag = 'scoped memory for up_conv_forward.2']
    %9 = vsyncpa [#allocation3], 0
    %s10 = scalar_lea.sflag [#allocation3], 1
    %11 = vsyncpa %s10, 0
    %12 = vsyncpa [#allocation6], 0
    %13 = vsyncpa [#allocation4], 0
    %s14 = scalar_lea.sflag [#allocation4], 1
    %15 = vsyncpa %s14, 0
    %16 = vsyncpa [#allocation9], 0
    %s17 = scalar_lea.sflag [#allocation9], 1
    %18 = vsyncpa %s17, 0
    loop: start=0, step=1, limit=6
    $region2: #{up_conv_forward.2} parent=1 // loop_pre_header
      _
    $region3: #{up_conv_forward.2} parent=1 // loop_header
      %s20 = sphi 0, %s24
      %p21 = scmp.ge.s32.totalorder %s20, 6
      %s27 = sphi 0, %s39
      %s28 = sphi 0, %s35
      %s29 = sphi 0, %s27
      %s30 = sphi 0, %s28
      %s31 = sphi 0, %s29
      %s32 = sphi 0, %s30
      %s44 = sphi 0, %s46
      %s47 = sphi 0, %s44
      %s48 = sphi 0, %s47
      %s64 = sphi 0, %s48
      %s68 = sphi 0, %s68
      %s70 = sphi 0, %s68
      %s71 = sphi 0, %s70
      %s85 = sphi 0, %s71
      %s93 = sphi 0, %s95
      %s96 = sphi 0, %s93
      %s97 = sphi 0, %s96
      %s113 = sphi 0, %s97
      %s121 = sphi 0, %s123
      %s124 = sphi 0, %s121
      %s125 = sphi 0, %s124
      %s141 = sphi 0, %s125
    $region4: #{up_conv_forward.2} parent=1 // loop_header_branch
      %23 = sbr.rel (%p21) target = $region8
    $region5: #{up_conv_forward.2} parent=1 // loop_body
      %s25 = ssub.s32 %s20, 1
      %s26 = ssub.s32 %s20, 2
      %s33 = sadd.s32 1, %s28
      %p34 = scmp.ge.s32.totalorder %s33, 2
      %s35 = scalar_select %p34, 0, %s33
      %s36 = sadd.s32 1, %s27
      %s37 = scalar_select %p34, %s36, %s27
      %p38 = scmp.ge.s32.totalorder %s37, 2
      %s39 = scalar_select %p38, 0, %s37
      %s40 = ssub.s32 %s27, %s39
      %s41 = ssub.s32 %s28, %s35
      %s42 = sor.u32 %s40, %s41
      %p43 = scmp.eq.s32.totalorder %s42, 0
      %s45 = sadd.s32 %s44, 1
      %s46 = scalar_select %p43, %s44, %s45
      %p49 = pneg %p43
      %p50 = scmp.eq.s32.totalorder %s20, 3
      %p51 = por %p49, %p50
      %p52 = scmp.ne.s32.totalorder %s44, %s47
      %p53 = scmp.eq.s32.totalorder %s20, 0
      %p54 = por %p52, %p53
      %p55 = scmp.ne.s32.totalorder %s44, %s47
      %p56 = scmp.eq.s32.totalorder %s25, 3
      %p57 = por %p55, %p56
      %p58 = scmp.ne.s32.totalorder %s47, %s48
      %p59 = scmp.eq.s32.totalorder %s25, 0
      %p60 = por %p58, %p59
      %p61 = scmp.ne.s32.totalorder %s47, %s48
      %p62 = scmp.eq.s32.totalorder %s26, 3
      %p63 = por %p61, %p62
      %p65 = scmp.ne.s32.totalorder %s48, %s64
      %p66 = scmp.eq.s32.totalorder %s26, 0
      %p67 = por %p65, %p66
      %s69 = sadd.s32 %s68, 1
      %p72 = scmp.eq.s32.totalorder %s20, 3
      %p73 = scmp.ne.s32.totalorder %s68, %s70
      %p74 = scmp.eq.s32.totalorder %s20, 0
      %p75 = por %p73, %p74
      %p76 = scmp.ne.s32.totalorder %s68, %s70
      %p77 = scmp.eq.s32.totalorder %s25, 3
      %p78 = por %p76, %p77
      %p79 = scmp.ne.s32.totalorder %s70, %s71
      %p80 = scmp.eq.s32.totalorder %s25, 0
      %p81 = por %p79, %p80
      %p82 = scmp.ne.s32.totalorder %s70, %s71
      %p83 = scmp.eq.s32.totalorder %s26, 3
      %p84 = por %p82, %p83
      %p86 = scmp.ne.s32.totalorder %s71, %s85
      %p87 = scmp.eq.s32.totalorder %s26, 0
      %p88 = por %p86, %p87
      %s89 = ssub.s32 %s27, %s39
      %s90 = ssub.s32 %s28, %s35
      %s91 = sor.u32 %s89, %s90
      %p92 = scmp.eq.s32.totalorder %s91, 0
      %s94 = sadd.s32 %s93, 1
      %s95 = scalar_select %p92, %s93, %s94
      %p98 = pneg %p92
      %p99 = scmp.eq.s32.totalorder %s20, 3
      %p100 = por %p98, %p99
      %p101 = scmp.ne.s32.totalorder %s93, %s96
      %p102 = scmp.eq.s32.totalorder %s20, 0
      %p103 = por %p101, %p102
      %p104 = scmp.ne.s32.totalorder %s93, %s96
      %p105 = scmp.eq.s32.totalorder %s25, 3
      %p106 = por %p104, %p105
      %p107 = scmp.ne.s32.totalorder %s96, %s97
      %p108 = scmp.eq.s32.totalorder %s25, 0
      %p109 = por %p107, %p108
      %p110 = scmp.ne.s32.totalorder %s96, %s97
      %p111 = scmp.eq.s32.totalorder %s26, 3
      %p112 = por %p110, %p111
      %p114 = scmp.ne.s32.totalorder %s97, %s113
      %p115 = scmp.eq.s32.totalorder %s26, 0
      %p116 = por %p114, %p115
      %s117 = ssub.s32 %s27, %s39
      %s118 = ssub.s32 %s28, %s35
      %s119 = sor.u32 %s117, %s118
      %p120 = scmp.eq.s32.totalorder %s119, 0
      %s122 = sadd.s32 %s121, 1
      %s123 = scalar_select %p120, %s121, %s122
      %p126 = pneg %p120
      %p127 = scmp.eq.s32.totalorder %s20, 3
      %p128 = por %p126, %p127
      %p129 = scmp.ne.s32.totalorder %s121, %s124
      %p130 = scmp.eq.s32.totalorder %s20, 0
      %p131 = por %p129, %p130
      %p132 = scmp.ne.s32.totalorder %s121, %s124
      %p133 = scmp.eq.s32.totalorder %s25, 3
      %p134 = por %p132, %p133
      %p135 = scmp.ne.s32.totalorder %s124, %s125
      %p136 = scmp.eq.s32.totalorder %s25, 0
      %p137 = por %p135, %p136
      %p138 = scmp.ne.s32.totalorder %s124, %s125
      %p139 = scmp.eq.s32.totalorder %s26, 3
      %p140 = por %p138, %p139
      %p142 = scmp.ne.s32.totalorder %s125, %s141
      %p143 = scmp.eq.s32.totalorder %s26, 0
      %p144 = por %p142, %p143
      %p145 = scmp.le.s32.totalorder 1, %s20
      %p146 = scmp.lt.s32.totalorder %s20, 5
      %p147 = pnand %p145, %p146
      %p148 = pneg %p147
      // Predicated region
      $region9: #{up_conv_forward.2} parent=5 // pred_check
        _
      $region10: #{up_conv_forward.2} parent=5 // pred_check_branch
        %150 = sbr.rel (%p147) target = $region12
      $region11: #{up_conv_forward.2} parent=5 // pred_region
        %s151 = ssub.s32 %s20, 1
        // Predicated region
        $region13: #{up_conv_forward.2} parent=11 // pred_check
          %p152 = pneg %p81
        $region14: #{up_conv_forward.2} parent=11 // pred_check_branch
          %154 = sbr.rel (%p152) target = $region16
        $region15: #{up_conv_forward.2} parent=11 // pred_region
          %s156 = ssub.s32 320, 320
          %157 = vsyncadd [#allocation6], %s156
          %s158 = sshll.u32 [#allocation5], 4
          %s159 = int_to_ptr.vmem [resolvable:$true] %s158
          %164 = dma.hbm_to_vmem [thread:$0]  %s1, 320, %s159, [#allocation6], 64, 64, 4
        $region16: #{up_conv_forward.2} parent=11 // pred_fallthru
          _
      $region12: #{up_conv_forward.2} parent=5 // pred_fallthru
        _
      %p165 = scmp.lt.s32.totalorder %s20, 4
      // Predicated region
      $region17: #{up_conv_forward.2} parent=5 // pred_check
        %p166 = pneg %p165
      $region18: #{up_conv_forward.2} parent=5 // pred_check_branch
        %168 = sbr.rel (%p166) target = $region20
      $region19: #{up_conv_forward.2} parent=5 // pred_region
        // Predicated region
        $region21: #{up_conv_forward.2} parent=19 // pred_check
          %p169 = pneg %p54
        $region22: #{up_conv_forward.2} parent=19 // pred_check_branch
          %171 = sbr.rel (%p169) target = $region24
        $region23: #{up_conv_forward.2} parent=19 // pred_region
          %s172 = sand.u32 %s44, 1
          %s173 = scalar_lea.sflag [#allocation3], %s172
          %s174 = sand.u32 %s44, 1
          %s175 = smul.addr %s174, 200
          %s176 = scalar_lea.vmem [#allocation2], %s175
          %s178 = ssub.s32 3200, 3200
          %179 = vsyncadd %s173, %s178
          %s180 = smul.addr %s28, 50
          %s181 = smul.addr %s27, 100
          %s182 = sadd.s32 %s180, %s181
          %s183 = smul.addr %s182, 64
          %s184 = scalar_lea.hbm %s0, %s183
          %s185 = sshll.u32 %s176, 4
          %s186 = int_to_ptr.vmem [resolvable:$true] %s185
          %191 = dma.hbm_to_vmem [thread:$0]  %s184, 3200, %s186, %s173, 64, 64, 4
        $region24: #{up_conv_forward.2} parent=19 // pred_fallthru
          _
      $region20: #{up_conv_forward.2} parent=5 // pred_fallthru
        _
      %p192 = scmp.le.s32.totalorder 1, %s20
      %p193 = scmp.lt.s32.totalorder %s20, 5
      %p194 = pnand %p192, %p193
      %p195 = pneg %p194
      // Predicated region
      $region25: #{up_conv_forward.2} parent=5 // pred_check
        _
      $region26: #{up_conv_forward.2} parent=5 // pred_check_branch
        %197 = sbr.rel (%p194) target = $region28
      $region27: #{up_conv_forward.2} parent=5 // pred_region
        %s198 = ssub.s32 %s20, 1
        %s199 = sand.u32 %s47, 1
        %s200 = scalar_lea.sflag [#allocation3], %s199
        %s201 = sand.u32 %s47, 1
        %s202 = smul.addr %s201, 200
        %s203 = scalar_lea.vmem [#allocation2], %s202
        // Predicated region
        $region29: #{up_conv_forward.2} parent=27 // pred_check
          %p204 = pneg %p60
        $region30: #{up_conv_forward.2} parent=27 // pred_check_branch
          %206 = sbr.rel (%p204) target = $region32
        $region31: #{up_conv_forward.2} parent=27 // pred_region
          %207 = dma.done %s200, 3200
        $region32: #{up_conv_forward.2} parent=27 // pred_fallthru
          _
        // Predicated region
        $region33: #{up_conv_forward.2} parent=27 // pred_check
          %p208 = pneg %p81
        $region34: #{up_conv_forward.2} parent=27 // pred_check_branch
          %210 = sbr.rel (%p208) target = $region36
        $region35: #{up_conv_forward.2} parent=27 // pred_region
          %211 = dma.done [#allocation6], 320
        $region36: #{up_conv_forward.2} parent=27 // pred_fallthru
          _
        %s212 = sand.u32 %s47, 1
        %s213 = scalar_lea.sflag [#allocation3], %s212
        %s214 = sand.u32 %s47, 1
        %s215 = smul.addr %s214, 200
        %s216 = scalar_lea.vmem [#allocation2], %s215
        %p217 = pneg %p60
        %p218 = pneg %p57
        %p219 = pneg %p81
        %p220 = pneg %p78
        %p221 = pneg %p109
        %p222 = pneg %p106
        %s223 = sand.u32 %s96, 1
        %s224 = scalar_lea.sflag [#allocation4], %s223
        %s225 = sand.u32 %s96, 1
        %s226 = smul.addr %s225, 256
        %s227 = scalar_lea.vmem [#allocation7], %s226
        %p228 = pneg %p137
        %p229 = pneg %p134
        %s230 = sand.u32 %s124, 1
        %s231 = scalar_lea.sflag [#allocation9], %s230
        %s232 = sand.u32 %s124, 1
        %s233 = smul.addr %s232, 2
        %s234 = scalar_lea.vmem [#allocation8], %s233
        %s235 = smul.u32 64, %s30
        %v237 = vld [vmem:[%s203] sm:$0xf]
        %v238 = vld [vmem:[%s203 + $0x4] sm:$0xf]
        %v239 = vld [vmem:[%s203 + $0x8] sm:$0xf]
        %v240 = vld [vmem:[%s203 + $0xc] sm:$0xf]
        %v241 = vld [vmem:[%s203 + $0x10] sm:$0x1]
        %v242 = vld [vmem:[%s203 + $0x14] sm:$0xf]
        %v243 = vld [vmem:[%s203 + $0x18] sm:$0xf]
        %v244 = vld [vmem:[%s203 + $0x1c] sm:$0xf]
        %v245 = vld [vmem:[%s203 + $0x20] sm:$0xf]
        %v246 = vld [vmem:[%s203 + $0x24] sm:$0x1]
        %v247 = vld [vmem:[%s203 + $0x28] sm:$0xf]
        %v248 = vld [vmem:[%s203 + $0x2c] sm:$0xf]
        %v249 = vld [vmem:[%s203 + $0x30] sm:$0xf]
        %v250 = vld [vmem:[%s203 + $0x34] sm:$0xf]
        %v251 = vld [vmem:[%s203 + $0x38] sm:$0x1]
        %v252 = vld [vmem:[%s203 + $0x3c] sm:$0xf]
        %v253 = vld [vmem:[%s203 + $0x40] sm:$0xf]
        %v254 = vld [vmem:[%s203 + $0x44] sm:$0xf]
        %v255 = vld [vmem:[%s203 + $0x48] sm:$0xf]
        %v256 = vld [vmem:[%s203 + $0x4c] sm:$0x1]
        %v257 = vld [vmem:[%s203 + $0x50] sm:$0xf]
        %v258 = vld [vmem:[%s203 + $0x54] sm:$0xf]
        %v259 = vld [vmem:[%s203 + $0x58] sm:$0xf]
        %v260 = vld [vmem:[%s203 + $0x5c] sm:$0xf]
        %v261 = vld [vmem:[%s203 + $0x60] sm:$0x1]
        %v262 = vld [vmem:[%s203 + $0x64] sm:$0xf]
        %v263 = vld [vmem:[%s203 + $0x68] sm:$0xf]
        %v264 = vld [vmem:[%s203 + $0x6c] sm:$0xf]
        %v265 = vld [vmem:[%s203 + $0x70] sm:$0xf]
        %v266 = vld [vmem:[%s203 + $0x74] sm:$0x1]
        %v267 = vld [vmem:[%s203 + $0x78] sm:$0xf]
        %v268 = vld [vmem:[%s203 + $0x7c] sm:$0xf]
        %v269 = vld [vmem:[%s203 + $0x80] sm:$0xf]
        %v270 = vld [vmem:[%s203 + $0x84] sm:$0xf]
        %v271 = vld [vmem:[%s203 + $0x88] sm:$0x1]
        %v272 = vld [vmem:[%s203 + $0x8c] sm:$0xf]
        %v273 = vld [vmem:[%s203 + $0x90] sm:$0xf]
        %v274 = vld [vmem:[%s203 + $0x94] sm:$0xf]
        %v275 = vld [vmem:[%s203 + $0x98] sm:$0xf]
        %v276 = vld [vmem:[%s203 + $0x9c] sm:$0x1]
        %v277 = vld [vmem:[%s203 + $0xa0] sm:$0xf]
        %v278 = vld [vmem:[%s203 + $0xa4] sm:$0xf]
        %v279 = vld [vmem:[%s203 + $0xa8] sm:$0xf]
        %v280 = vld [vmem:[%s203 + $0xac] sm:$0xf]
        %v281 = vld [vmem:[%s203 + $0xb0] sm:$0x1]
        %v282 = vld [vmem:[%s203 + $0xb4] sm:$0xf]
        %v283 = vld [vmem:[%s203 + $0xb8] sm:$0xf]
        %v284 = vld [vmem:[%s203 + $0xbc] sm:$0xf]
        %v285 = vld [vmem:[%s203 + $0xc0] sm:$0xf]
        %v286 = vld [vmem:[%s203 + $0xc4] sm:$0x1]
        %v323 = vunpack.c.l.b16 %v237
        %v324 = vunpack.c.l.b16 %v238
        %v325 = vunpack.c.l.b16 %v239
        %v326 = vunpack.c.l.b16 %v240
        %v327 = vunpack.c.l.b16 %v242
        %v328 = vunpack.c.l.b16 %v243
        %v329 = vunpack.c.l.b16 %v244
        %v330 = vunpack.c.l.b16 %v245
        %v331 = vunpack.c.l.b16 %v247
        %v332 = vunpack.c.l.b16 %v248
        %v333 = vunpack.c.l.b16 %v249
        %v334 = vunpack.c.l.b16 %v250
        %v335 = vunpack.c.l.b16 %v252
        %v336 = vunpack.c.l.b16 %v253
        %v337 = vunpack.c.l.b16 %v254
        %v338 = vunpack.c.l.b16 %v255
        %v339 = vunpack.c.l.b16 %v257
        %v340 = vunpack.c.l.b16 %v258
        %v341 = vunpack.c.l.b16 %v259
        %v342 = vunpack.c.l.b16 %v260
        %v343 = vunpack.c.l.b16 %v262
        %v344 = vunpack.c.l.b16 %v263
        %v345 = vunpack.c.l.b16 %v264
        %v346 = vunpack.c.l.b16 %v265
        %v347 = vunpack.c.l.b16 %v267
        %v348 = vunpack.c.l.b16 %v268
        %v349 = vunpack.c.l.b16 %v269
        %v350 = vunpack.c.l.b16 %v270
        %v351 = vunpack.c.l.b16 %v272
        %v352 = vunpack.c.l.b16 %v273
        %v353 = vunpack.c.l.b16 %v274
        %v354 = vunpack.c.l.b16 %v275
        %v355 = vunpack.c.l.b16 %v277
        %v356 = vunpack.c.l.b16 %v278
        %v357 = vunpack.c.l.b16 %v279
        %v358 = vunpack.c.l.b16 %v280
        %v359 = vpack.c.b16 %v324, %v323
        %v360 = vpack.c.b16 %v326, %v325
        %v361 = vpack.c.b16 %v328, %v327
        %v362 = vpack.c.b16 %v330, %v329
        %v363 = vpack.c.b16 %v332, %v331
        %v364 = vpack.c.b16 %v334, %v333
        %v365 = vpack.c.b16 %v336, %v335
        %v366 = vpack.c.b16 %v338, %v337
        %v367 = vpack.c.b16 %v340, %v339
        %v368 = vpack.c.b16 %v342, %v341
        %v369 = vpack.c.b16 %v344, %v343
        %v370 = vpack.c.b16 %v346, %v345
        %v371 = vpack.c.b16 %v348, %v347
        %v372 = vpack.c.b16 %v350, %v349
        %v373 = vpack.c.b16 %v352, %v351
        %v374 = vpack.c.b16 %v354, %v353
        %v375 = vpack.c.b16 %v356, %v355
        %v376 = vpack.c.b16 %v358, %v357
        %v386 = vunpack.c.l.b16 %v241
        %v387 = vunpack.c.l.b16 %v246
        %v388 = vunpack.c.l.b16 %v251
        %v389 = vunpack.c.l.b16 %v256
        %v390 = vunpack.c.l.b16 %v261
        %v391 = vunpack.c.l.b16 %v266
        %v392 = vunpack.c.l.b16 %v271
        %v393 = vunpack.c.l.b16 %v276
        %v394 = vunpack.c.l.b16 %v281
        %v395 = vpack.c.b16 %v386, %v386
        %v396 = vpack.c.b16 %v387, %v387
        %v397 = vpack.c.b16 %v388, %v388
        %v398 = vpack.c.b16 %v389, %v389
        %v399 = vpack.c.b16 %v390, %v390
        %v400 = vpack.c.b16 %v391, %v391
        %v401 = vpack.c.b16 %v392, %v392
        %v402 = vpack.c.b16 %v393, %v393
        %v403 = vpack.c.b16 %v394, %v394
        %vm404 = vsmask.f32 7424
        %v406 = vshrl.u32 %v359, 16
        %v408 = vshll.u32 %v359, 16
        %v410 = vrot.slane %v408, 1
        %v411 = vor.u32 %v406, %v410
        %v413 = vshll.u32 %v360, 16
        %v415 = vrot.slane %v413, 1
        %v416 = vsel %vm404, %v411, %v415
        %v417 = vshrl.u32 %v360, 16
        %v419 = vor.u32 %v417, %v415
        %v421 = vshll.u32 %v395, 16
        %v423 = vrot.slane %v421, 1
        %v424 = vsel %vm404, %v419, %v423
        %v426 = vshrl.u32 %v361, 16
        %v428 = vshll.u32 %v361, 16
        %v430 = vrot.slane %v428, 1
        %v431 = vor.u32 %v426, %v430
        %v433 = vshll.u32 %v362, 16
        %v435 = vrot.slane %v433, 1
        %v436 = vsel %vm404, %v431, %v435
        %v437 = vshrl.u32 %v362, 16
        %v439 = vor.u32 %v437, %v435
        %v441 = vshll.u32 %v396, 16
        %v443 = vrot.slane %v441, 1
        %v444 = vsel %vm404, %v439, %v443
        %v446 = vshrl.u32 %v363, 16
        %v448 = vshll.u32 %v363, 16
        %v450 = vrot.slane %v448, 1
        %v451 = vor.u32 %v446, %v450
        %v453 = vshll.u32 %v364, 16
        %v455 = vrot.slane %v453, 1
        %v456 = vsel %vm404, %v451, %v455
        %v457 = vshrl.u32 %v364, 16
        %v459 = vor.u32 %v457, %v455
        %v461 = vshll.u32 %v397, 16
        %v463 = vrot.slane %v461, 1
        %v464 = vsel %vm404, %v459, %v463
        %v466 = vshrl.u32 %v365, 16
        %v468 = vshll.u32 %v365, 16
        %v470 = vrot.slane %v468, 1
        %v471 = vor.u32 %v466, %v470
        %v473 = vshll.u32 %v366, 16
        %v475 = vrot.slane %v473, 1
        %v476 = vsel %vm404, %v471, %v475
        %v477 = vshrl.u32 %v366, 16
        %v479 = vor.u32 %v477, %v475
        %v481 = vshll.u32 %v398, 16
        %v483 = vrot.slane %v481, 1
        %v484 = vsel %vm404, %v479, %v483
        %v486 = vshrl.u32 %v367, 16
        %v488 = vshll.u32 %v367, 16
        %v490 = vrot.slane %v488, 1
        %v491 = vor.u32 %v486, %v490
        %v493 = vshll.u32 %v368, 16
        %v495 = vrot.slane %v493, 1
        %v496 = vsel %vm404, %v491, %v495
        %v497 = vshrl.u32 %v368, 16
        %v499 = vor.u32 %v497, %v495
        %v501 = vshll.u32 %v399, 16
        %v503 = vrot.slane %v501, 1
        %v504 = vsel %vm404, %v499, %v503
        %v506 = vshrl.u32 %v369, 16
        %v508 = vshll.u32 %v369, 16
        %v510 = vrot.slane %v508, 1
        %v511 = vor.u32 %v506, %v510
        %v513 = vshll.u32 %v370, 16
        %v515 = vrot.slane %v513, 1
        %v516 = vsel %vm404, %v511, %v515
        %v517 = vshrl.u32 %v370, 16
        %v519 = vor.u32 %v517, %v515
        %v521 = vshll.u32 %v400, 16
        %v523 = vrot.slane %v521, 1
        %v524 = vsel %vm404, %v519, %v523
        %v526 = vshrl.u32 %v371, 16
        %v528 = vshll.u32 %v371, 16
        %v530 = vrot.slane %v528, 1
        %v531 = vor.u32 %v526, %v530
        %v533 = vshll.u32 %v372, 16
        %v535 = vrot.slane %v533, 1
        %v536 = vsel %vm404, %v531, %v535
        %v537 = vshrl.u32 %v372, 16
        %v539 = vor.u32 %v537, %v535
        %v541 = vshll.u32 %v401, 16
        %v543 = vrot.slane %v541, 1
        %v544 = vsel %vm404, %v539, %v543
        %v546 = vshrl.u32 %v373, 16
        %v548 = vshll.u32 %v373, 16
        %v550 = vrot.slane %v548, 1
        %v551 = vor.u32 %v546, %v550
        %v553 = vshll.u32 %v374, 16
        %v555 = vrot.slane %v553, 1
        %v556 = vsel %vm404, %v551, %v555
        %v557 = vshrl.u32 %v374, 16
        %v559 = vor.u32 %v557, %v555
        %v561 = vshll.u32 %v402, 16
        %v563 = vrot.slane %v561, 1
        %v564 = vsel %vm404, %v559, %v563
        %v566 = vshrl.u32 %v375, 16
        %v568 = vshll.u32 %v375, 16
        %v570 = vrot.slane %v568, 1
        %v571 = vor.u32 %v566, %v570
        %v573 = vshll.u32 %v376, 16
        %v575 = vrot.slane %v573, 1
        %v576 = vsel %vm404, %v571, %v575
        %v577 = vshrl.u32 %v376, 16
        %v579 = vor.u32 %v577, %v575
        %v581 = vshll.u32 %v403, 16
        %v583 = vrot.slane %v581, 1
        %v584 = vsel %vm404, %v579, %v583
        %585 = vrot.lane.b32.xlu0 %v416, 4
        %v586 = vpop.permute.xlu0 %585
        %587 = vrot.lane.b32.xlu0 %v424, 4
        %v588 = vpop.permute.xlu0 %587
        %589 = vrot.lane.b32.xlu0 %v436, 4
        %v590 = vpop.permute.xlu0 %589
        %591 = vrot.lane.b32.xlu0 %v444, 4
        %v592 = vpop.permute.xlu0 %591
        %593 = vrot.lane.b32.xlu0 %v456, 4
        %v594 = vpop.permute.xlu0 %593
        %595 = vrot.lane.b32.xlu0 %v464, 4
        %v596 = vpop.permute.xlu0 %595
        %597 = vrot.lane.b32.xlu0 %v476, 4
        %v598 = vpop.permute.xlu0 %597
        %599 = vrot.lane.b32.xlu0 %v484, 4
        %v600 = vpop.permute.xlu0 %599
        %601 = vrot.lane.b32.xlu0 %v496, 4
        %v602 = vpop.permute.xlu0 %601
        %603 = vrot.lane.b32.xlu0 %v504, 4
        %v604 = vpop.permute.xlu0 %603
        %605 = vrot.lane.b32.xlu0 %v516, 4
        %v606 = vpop.permute.xlu0 %605
        %607 = vrot.lane.b32.xlu0 %v524, 4
        %v608 = vpop.permute.xlu0 %607
        %609 = vrot.lane.b32.xlu0 %v536, 4
        %v610 = vpop.permute.xlu0 %609
        %611 = vrot.lane.b32.xlu0 %v544, 4
        %v612 = vpop.permute.xlu0 %611
        %613 = vrot.lane.b32.xlu0 %v556, 4
        %v614 = vpop.permute.xlu0 %613
        %615 = vrot.lane.b32.xlu0 %v564, 4
        %v616 = vpop.permute.xlu0 %615
        %617 = vrot.lane.b32.xlu0 %v576, 4
        %v618 = vpop.permute.xlu0 %617
        %619 = vrot.lane.b32.xlu0 %v584, 4
        %v620 = vpop.permute.xlu0 %619
        %vm621 = vcmask 1046528
        %v622 = vrot.slane %v359, 1
        %v623 = vrot.slane %v360, 1
        %v624 = vsel %vm621, %v622, %v623
        %v625 = vrot.slane %v395, 1
        %v626 = vsel %vm621, %v623, %v625
        %v627 = vrot.slane %v361, 1
        %v628 = vrot.slane %v362, 1
        %v629 = vsel %vm621, %v627, %v628
        %v630 = vrot.slane %v396, 1
        %v631 = vsel %vm621, %v628, %v630
        %v632 = vrot.slane %v363, 1
        %v633 = vrot.slane %v364, 1
        %v634 = vsel %vm621, %v632, %v633
        %v635 = vrot.slane %v397, 1
        %v636 = vsel %vm621, %v633, %v635
        %v637 = vrot.slane %v365, 1
        %v638 = vrot.slane %v366, 1
        %v639 = vsel %vm621, %v637, %v638
        %v640 = vrot.slane %v398, 1
        %v641 = vsel %vm621, %v638, %v640
        %v642 = vrot.slane %v367, 1
        %v643 = vrot.slane %v368, 1
        %v644 = vsel %vm621, %v642, %v643
        %v645 = vrot.slane %v399, 1
        %v646 = vsel %vm621, %v643, %v645
        %v647 = vrot.slane %v369, 1
        %v648 = vrot.slane %v370, 1
        %v649 = vsel %vm621, %v647, %v648
        %v650 = vrot.slane %v400, 1
        %v651 = vsel %vm621, %v648, %v650
        %v652 = vrot.slane %v371, 1
        %v653 = vrot.slane %v372, 1
        %v654 = vsel %vm621, %v652, %v653
        %v655 = vrot.slane %v401, 1
        %v656 = vsel %vm621, %v653, %v655
        %v657 = vrot.slane %v373, 1
        %v658 = vrot.slane %v374, 1
        %v659 = vsel %vm621, %v657, %v658
        %v660 = vrot.slane %v402, 1
        %v661 = vsel %vm621, %v658, %v660
        %v662 = vrot.slane %v375, 1
        %v663 = vrot.slane %v376, 1
        %v664 = vsel %vm621, %v662, %v663
        %v665 = vrot.slane %v403, 1
        %v666 = vsel %vm621, %v663, %v665
        %667 = vrot.lane.b32.xlu0 %v624, 8
        %v668 = vpop.permute.xlu0 %667
        %669 = vrot.lane.b32.xlu0 %v626, 8
        %v670 = vpop.permute.xlu0 %669
        %671 = vrot.lane.b32.xlu0 %v629, 8
        %v672 = vpop.permute.xlu0 %671
        %673 = vrot.lane.b32.xlu0 %v631, 8
        %v674 = vpop.permute.xlu0 %673
        %675 = vrot.lane.b32.xlu0 %v634, 8
        %v676 = vpop.permute.xlu0 %675
        %677 = vrot.lane.b32.xlu0 %v636, 8
        %v678 = vpop.permute.xlu0 %677
        %679 = vrot.lane.b32.xlu0 %v639, 8
        %v680 = vpop.permute.xlu0 %679
        %681 = vrot.lane.b32.xlu0 %v641, 8
        %v682 = vpop.permute.xlu0 %681
        %683 = vrot.lane.b32.xlu0 %v644, 8
        %v684 = vpop.permute.xlu0 %683
        %685 = vrot.lane.b32.xlu0 %v646, 8
        %v686 = vpop.permute.xlu0 %685
        %687 = vrot.lane.b32.xlu0 %v649, 8
        %v688 = vpop.permute.xlu0 %687
        %689 = vrot.lane.b32.xlu0 %v651, 8
        %v690 = vpop.permute.xlu0 %689
        %691 = vrot.lane.b32.xlu0 %v654, 8
        %v692 = vpop.permute.xlu0 %691
        %693 = vrot.lane.b32.xlu0 %v656, 8
        %v694 = vpop.permute.xlu0 %693
        %695 = vrot.lane.b32.xlu0 %v659, 8
        %v696 = vpop.permute.xlu0 %695
        %697 = vrot.lane.b32.xlu0 %v661, 8
        %v698 = vpop.permute.xlu0 %697
        %699 = vrot.lane.b32.xlu0 %v664, 8
        %v700 = vpop.permute.xlu0 %699
        %701 = vrot.lane.b32.xlu0 %v666, 8
        %v702 = vpop.permute.xlu0 %701
        %703 = vrot.lane.b32.xlu0 %v361, 12
        %v704 = vpop.permute.xlu0 %703
        %705 = vrot.lane.b32.xlu0 %v362, 12
        %v706 = vpop.permute.xlu0 %705
        %707 = vrot.lane.b32.xlu0 %v363, 12
        %v708 = vpop.permute.xlu0 %707
        %709 = vrot.lane.b32.xlu0 %v364, 12
        %v710 = vpop.permute.xlu0 %709
        %711 = vrot.lane.b32.xlu0 %v365, 12
        %v712 = vpop.permute.xlu0 %711
        %713 = vrot.lane.b32.xlu0 %v366, 12
        %v714 = vpop.permute.xlu0 %713
        %715 = vrot.lane.b32.xlu0 %v367, 12
        %v716 = vpop.permute.xlu0 %715
        %717 = vrot.lane.b32.xlu0 %v368, 12
        %v718 = vpop.permute.xlu0 %717
        %719 = vrot.lane.b32.xlu0 %v369, 12
        %v720 = vpop.permute.xlu0 %719
        %721 = vrot.lane.b32.xlu0 %v370, 12
        %v722 = vpop.permute.xlu0 %721
        %723 = vrot.lane.b32.xlu0 %v371, 12
        %v724 = vpop.permute.xlu0 %723
        %725 = vrot.lane.b32.xlu0 %v372, 12
        %v726 = vpop.permute.xlu0 %725
        %727 = vrot.lane.b32.xlu0 %v373, 12
        %v728 = vpop.permute.xlu0 %727
        %729 = vrot.lane.b32.xlu0 %v374, 12
        %v730 = vpop.permute.xlu0 %729
        %731 = vrot.lane.b32.xlu0 %v375, 12
        %v732 = vpop.permute.xlu0 %731
        %733 = vrot.lane.b32.xlu0 %v376, 12
        %v734 = vpop.permute.xlu0 %733
        %735 = vrot.lane.b32.xlu0 %v436, 16
        %v736 = vpop.permute.xlu0 %735
        %737 = vrot.lane.b32.xlu0 %v444, 16
        %v738 = vpop.permute.xlu0 %737
        %739 = vrot.lane.b32.xlu0 %v456, 16
        %v740 = vpop.permute.xlu0 %739
        %741 = vrot.lane.b32.xlu0 %v464, 16
        %v742 = vpop.permute.xlu0 %741
        %743 = vrot.lane.b32.xlu0 %v476, 16
        %v744 = vpop.permute.xlu0 %743
        %745 = vrot.lane.b32.xlu0 %v484, 16
        %v746 = vpop.permute.xlu0 %745
        %747 = vrot.lane.b32.xlu0 %v496, 16
        %v748 = vpop.permute.xlu0 %747
        %749 = vrot.lane.b32.xlu0 %v504, 16
        %v750 = vpop.permute.xlu0 %749
        %751 = vrot.lane.b32.xlu0 %v516, 16
        %v752 = vpop.permute.xlu0 %751
        %753 = vrot.lane.b32.xlu0 %v524, 16
        %v754 = vpop.permute.xlu0 %753
        %755 = vrot.lane.b32.xlu0 %v536, 16
        %v756 = vpop.permute.xlu0 %755
        %757 = vrot.lane.b32.xlu0 %v544, 16
        %v758 = vpop.permute.xlu0 %757
        %759 = vrot.lane.b32.xlu0 %v556, 16
        %v760 = vpop.permute.xlu0 %759
        %761 = vrot.lane.b32.xlu0 %v564, 16
        %v762 = vpop.permute.xlu0 %761
        %763 = vrot.lane.b32.xlu0 %v576, 16
        %v764 = vpop.permute.xlu0 %763
        %765 = vrot.lane.b32.xlu0 %v584, 16
        %v766 = vpop.permute.xlu0 %765
        %767 = vrot.lane.b32.xlu0 %v629, 20
        %v768 = vpop.permute.xlu0 %767
        %769 = vrot.lane.b32.xlu0 %v631, 20
        %v770 = vpop.permute.xlu0 %769
        %771 = vrot.lane.b32.xlu0 %v634, 20
        %v772 = vpop.permute.xlu0 %771
        %773 = vrot.lane.b32.xlu0 %v636, 20
        %v774 = vpop.permute.xlu0 %773
        %775 = vrot.lane.b32.xlu0 %v639, 20
        %v776 = vpop.permute.xlu0 %775
        %777 = vrot.lane.b32.xlu0 %v641, 20
        %v778 = vpop.permute.xlu0 %777
        %779 = vrot.lane.b32.xlu0 %v644, 20
        %v780 = vpop.permute.xlu0 %779
        %781 = vrot.lane.b32.xlu0 %v646, 20
        %v782 = vpop.permute.xlu0 %781
        %783 = vrot.lane.b32.xlu0 %v649, 20
        %v784 = vpop.permute.xlu0 %783
        %785 = vrot.lane.b32.xlu0 %v651, 20
        %v786 = vpop.permute.xlu0 %785
        %787 = vrot.lane.b32.xlu0 %v654, 20
        %v788 = vpop.permute.xlu0 %787
        %789 = vrot.lane.b32.xlu0 %v656, 20
        %v790 = vpop.permute.xlu0 %789
        %791 = vrot.lane.b32.xlu0 %v659, 20
        %v792 = vpop.permute.xlu0 %791
        %793 = vrot.lane.b32.xlu0 %v661, 20
        %v794 = vpop.permute.xlu0 %793
        %795 = vrot.lane.b32.xlu0 %v664, 20
        %v796 = vpop.permute.xlu0 %795
        %797 = vrot.lane.b32.xlu0 %v666, 20
        %v798 = vpop.permute.xlu0 %797
        %v803 = vunpack.c.l.b16 %v282
        %v804 = vunpack.c.l.b16 %v283
        %v805 = vunpack.c.l.b16 %v284
        %v806 = vunpack.c.l.b16 %v285
        %v807 = vpack.c.b16 %v804, %v803
        %v808 = vpack.c.b16 %v806, %v805
        %809 = vrot.lane.b32.xlu0 %v361, 24
        %v810 = vpop.permute.xlu0 %809
        %811 = vrot.lane.b32.xlu0 %v362, 24
        %v812 = vpop.permute.xlu0 %811
        %813 = vrot.lane.b32.xlu0 %v363, 24
        %v814 = vpop.permute.xlu0 %813
        %815 = vrot.lane.b32.xlu0 %v364, 24
        %v816 = vpop.permute.xlu0 %815
        %817 = vrot.lane.b32.xlu0 %v365, 24
        %v818 = vpop.permute.xlu0 %817
        %819 = vrot.lane.b32.xlu0 %v366, 24
        %v820 = vpop.permute.xlu0 %819
        %821 = vrot.lane.b32.xlu0 %v367, 24
        %v822 = vpop.permute.xlu0 %821
        %823 = vrot.lane.b32.xlu0 %v368, 24
        %v824 = vpop.permute.xlu0 %823
        %825 = vrot.lane.b32.xlu0 %v369, 24
        %v826 = vpop.permute.xlu0 %825
        %827 = vrot.lane.b32.xlu0 %v370, 24
        %v828 = vpop.permute.xlu0 %827
        %829 = vrot.lane.b32.xlu0 %v371, 24
        %v830 = vpop.permute.xlu0 %829
        %831 = vrot.lane.b32.xlu0 %v372, 24
        %v832 = vpop.permute.xlu0 %831
        %833 = vrot.lane.b32.xlu0 %v373, 24
        %v834 = vpop.permute.xlu0 %833
        %835 = vrot.lane.b32.xlu0 %v374, 24
        %v836 = vpop.permute.xlu0 %835
        %837 = vrot.lane.b32.xlu0 %v375, 24
        %v838 = vpop.permute.xlu0 %837
        %839 = vrot.lane.b32.xlu0 %v376, 24
        %v840 = vpop.permute.xlu0 %839
        %841 = vrot.lane.b32.xlu0 %v807, 24
        %v842 = vpop.permute.xlu0 %841
        %843 = vrot.lane.b32.xlu0 %v808, 24
        %v844 = vpop.permute.xlu0 %843
        %v846 = vunpack.c.l.b16 %v286
        %v847 = vpack.c.b16 %v846, %v846
        %v849 = vshrl.u32 %v807, 16
        %v851 = vshll.u32 %v807, 16
        %v853 = vrot.slane %v851, 1
        %v854 = vor.u32 %v849, %v853
        %v856 = vshll.u32 %v808, 16
        %v858 = vrot.slane %v856, 1
        %v859 = vsel %vm404, %v854, %v858
        %v860 = vshrl.u32 %v808, 16
        %v862 = vor.u32 %v860, %v858
        %v864 = vshll.u32 %v847, 16
        %v866 = vrot.slane %v864, 1
        %v867 = vsel %vm404, %v862, %v866
        %868 = vrot.lane.b32.xlu0 %v436, 28
        %v869 = vpop.permute.xlu0 %868
        %870 = vrot.lane.b32.xlu0 %v444, 28
        %v871 = vpop.permute.xlu0 %870
        %872 = vrot.lane.b32.xlu0 %v456, 28
        %v873 = vpop.permute.xlu0 %872
        %874 = vrot.lane.b32.xlu0 %v464, 28
        %v875 = vpop.permute.xlu0 %874
        %876 = vrot.lane.b32.xlu0 %v476, 28
        %v877 = vpop.permute.xlu0 %876
        %878 = vrot.lane.b32.xlu0 %v484, 28
        %v879 = vpop.permute.xlu0 %878
        %880 = vrot.lane.b32.xlu0 %v496, 28
        %v881 = vpop.permute.xlu0 %880
        %882 = vrot.lane.b32.xlu0 %v504, 28
        %v883 = vpop.permute.xlu0 %882
        %884 = vrot.lane.b32.xlu0 %v516, 28
        %v885 = vpop.permute.xlu0 %884
        %886 = vrot.lane.b32.xlu0 %v524, 28
        %v887 = vpop.permute.xlu0 %886
        %888 = vrot.lane.b32.xlu0 %v536, 28
        %v889 = vpop.permute.xlu0 %888
        %890 = vrot.lane.b32.xlu0 %v544, 28
        %v891 = vpop.permute.xlu0 %890
        %892 = vrot.lane.b32.xlu0 %v556, 28
        %v893 = vpop.permute.xlu0 %892
        %894 = vrot.lane.b32.xlu0 %v564, 28
        %v895 = vpop.permute.xlu0 %894
        %896 = vrot.lane.b32.xlu0 %v576, 28
        %v897 = vpop.permute.xlu0 %896
        %898 = vrot.lane.b32.xlu0 %v584, 28
        %v899 = vpop.permute.xlu0 %898
        %900 = vrot.lane.b32.xlu0 %v859, 28
        %v901 = vpop.permute.xlu0 %900
        %902 = vrot.lane.b32.xlu0 %v867, 28
        %v903 = vpop.permute.xlu0 %902
        %v904 = vrot.slane %v807, 1
        %v905 = vrot.slane %v808, 1
        %v906 = vsel %vm621, %v904, %v905
        %v907 = vrot.slane %v847, 1
        %v908 = vsel %vm621, %v905, %v907
        %909 = vrot.lane.b32.xlu0 %v629, 32
        %v910 = vpop.permute.xlu0 %909
        %911 = vrot.lane.b32.xlu0 %v631, 32
        %v912 = vpop.permute.xlu0 %911
        %913 = vrot.lane.b32.xlu0 %v634, 32
        %v914 = vpop.permute.xlu0 %913
        %915 = vrot.lane.b32.xlu0 %v636, 32
        %v916 = vpop.permute.xlu0 %915
        %917 = vrot.lane.b32.xlu0 %v639, 32
        %v918 = vpop.permute.xlu0 %917
        %919 = vrot.lane.b32.xlu0 %v641, 32
        %v920 = vpop.permute.xlu0 %919
        %921 = vrot.lane.b32.xlu0 %v644, 32
        %v922 = vpop.permute.xlu0 %921
        %923 = vrot.lane.b32.xlu0 %v646, 32
        %v924 = vpop.permute.xlu0 %923
        %925 = vrot.lane.b32.xlu0 %v649, 32
        %v926 = vpop.permute.xlu0 %925
        %927 = vrot.lane.b32.xlu0 %v651, 32
        %v928 = vpop.permute.xlu0 %927
        %929 = vrot.lane.b32.xlu0 %v654, 32
        %v930 = vpop.permute.xlu0 %929
        %931 = vrot.lane.b32.xlu0 %v656, 32
        %v932 = vpop.permute.xlu0 %931
        %933 = vrot.lane.b32.xlu0 %v659, 32
        %v934 = vpop.permute.xlu0 %933
        %935 = vrot.lane.b32.xlu0 %v661, 32
        %v936 = vpop.permute.xlu0 %935
        %937 = vrot.lane.b32.xlu0 %v664, 32
        %v938 = vpop.permute.xlu0 %937
        %939 = vrot.lane.b32.xlu0 %v666, 32
        %v940 = vpop.permute.xlu0 %939
        %941 = vrot.lane.b32.xlu0 %v906, 32
        %v942 = vpop.permute.xlu0 %941
        %943 = vrot.lane.b32.xlu0 %v908, 32
        %v944 = vpop.permute.xlu0 %943
        %vm945 = vcmask 31744
        %v947 = vsel %vm945, %v359, %v586
        %v949 = vsel %vm945, %v360, %v588
        %v951 = vsel %vm945, %v361, %v590
        %v953 = vsel %vm945, %v362, %v592
        %v955 = vsel %vm945, %v363, %v594
        %v957 = vsel %vm945, %v364, %v596
        %v959 = vsel %vm945, %v365, %v598
        %v961 = vsel %vm945, %v366, %v600
        %v963 = vsel %vm945, %v367, %v602
        %v965 = vsel %vm945, %v368, %v604
        %v967 = vsel %vm945, %v369, %v606
        %v969 = vsel %vm945, %v370, %v608
        %v971 = vsel %vm945, %v371, %v610
        %v973 = vsel %vm945, %v372, %v612
        %v975 = vsel %vm945, %v373, %v614
        %v977 = vsel %vm945, %v374, %v616
        %v979 = vsel %vm945, %v375, %v618
        %v981 = vsel %vm945, %v376, %v620
        %vm982 = vcmask 64512
        %v984 = vsel %vm982, %v947, %v668
        %v986 = vsel %vm982, %v949, %v670
        %v988 = vsel %vm982, %v951, %v672
        %v990 = vsel %vm982, %v953, %v674
        %v992 = vsel %vm982, %v955, %v676
        %v994 = vsel %vm982, %v957, %v678
        %v996 = vsel %vm982, %v959, %v680
        %v998 = vsel %vm982, %v961, %v682
        %v1000 = vsel %vm982, %v963, %v684
        %v1002 = vsel %vm982, %v965, %v686
        %v1004 = vsel %vm982, %v967, %v688
        %v1006 = vsel %vm982, %v969, %v690
        %v1008 = vsel %vm982, %v971, %v692
        %v1010 = vsel %vm982, %v973, %v694
        %v1012 = vsel %vm982, %v975, %v696
        %v1014 = vsel %vm982, %v977, %v698
        %v1016 = vsel %vm982, %v979, %v700
        %v1018 = vsel %vm982, %v981, %v702
        %vm1019 = vcmask 97280
        %v1021 = vsel %vm1019, %v984, %v704
        %v1023 = vsel %vm1019, %v986, %v706
        %v1024 = vsel %vm1019, %v988, %v704
        %v1025 = vsel %vm1019, %v990, %v706
        %v1027 = vsel %vm1019, %v988, %v708
        %v1029 = vsel %vm1019, %v990, %v710
        %v1030 = vsel %vm1019, %v992, %v708
        %v1031 = vsel %vm1019, %v994, %v710
        %v1033 = vsel %vm1019, %v992, %v712
        %v1035 = vsel %vm1019, %v994, %v714
        %v1036 = vsel %vm1019, %v996, %v712
        %v1037 = vsel %vm1019, %v998, %v714
        %v1039 = vsel %vm1019, %v996, %v716
        %v1041 = vsel %vm1019, %v998, %v718
        %v1042 = vsel %vm1019, %v1000, %v716
        %v1043 = vsel %vm1019, %v1002, %v718
        %v1045 = vsel %vm1019, %v1000, %v720
        %v1047 = vsel %vm1019, %v1002, %v722
        %v1048 = vsel %vm1019, %v1004, %v720
        %v1049 = vsel %vm1019, %v1006, %v722
        %v1051 = vsel %vm1019, %v1004, %v724
        %v1053 = vsel %vm1019, %v1006, %v726
        %v1054 = vsel %vm1019, %v1008, %v724
        %v1055 = vsel %vm1019, %v1010, %v726
        %v1057 = vsel %vm1019, %v1008, %v728
        %v1059 = vsel %vm1019, %v1010, %v730
        %v1060 = vsel %vm1019, %v1012, %v728
        %v1061 = vsel %vm1019, %v1014, %v730
        %v1063 = vsel %vm1019, %v1012, %v732
        %v1065 = vsel %vm1019, %v1014, %v734
        %v1066 = vsel %vm1019, %v1016, %v732
        %v1067 = vsel %vm1019, %v1018, %v734
        %vm1068 = vcmask 130048
        %v1070 = vsel %vm1068, %v1021, %v736
        %v1072 = vsel %vm1068, %v1023, %v738
        %v1073 = vsel %vm1068, %v1024, %v736
        %v1074 = vsel %vm1068, %v1025, %v738
        %v1076 = vsel %vm1068, %v1027, %v740
        %v1078 = vsel %vm1068, %v1029, %v742
        %v1079 = vsel %vm1068, %v1030, %v740
        %v1080 = vsel %vm1068, %v1031, %v742
        %v1082 = vsel %vm1068, %v1033, %v744
        %v1084 = vsel %vm1068, %v1035, %v746
        %v1085 = vsel %vm1068, %v1036, %v744
        %v1086 = vsel %vm1068, %v1037, %v746
        %v1088 = vsel %vm1068, %v1039, %v748
        %v1090 = vsel %vm1068, %v1041, %v750
        %v1091 = vsel %vm1068, %v1042, %v748
        %v1092 = vsel %vm1068, %v1043, %v750
        %v1094 = vsel %vm1068, %v1045, %v752
        %v1096 = vsel %vm1068, %v1047, %v754
        %v1097 = vsel %vm1068, %v1048, %v752
        %v1098 = vsel %vm1068, %v1049, %v754
        %v1100 = vsel %vm1068, %v1051, %v756
        %v1102 = vsel %vm1068, %v1053, %v758
        %v1103 = vsel %vm1068, %v1054, %v756
        %v1104 = vsel %vm1068, %v1055, %v758
        %v1106 = vsel %vm1068, %v1057, %v760
        %v1108 = vsel %vm1068, %v1059, %v762
        %v1109 = vsel %vm1068, %v1060, %v760
        %v1110 = vsel %vm1068, %v1061, %v762
        %v1112 = vsel %vm1068, %v1063, %v764
        %v1114 = vsel %vm1068, %v1065, %v766
        %v1115 = vsel %vm1068, %v1066, %v764
        %v1116 = vsel %vm1068, %v1067, %v766
        %vm1117 = vcmask 162816
        %v1119 = vsel %vm1117, %v1070, %v768
        %v1121 = vsel %vm1117, %v1072, %v770
        %v1122 = vsel %vm1117, %v1073, %v768
        %v1123 = vsel %vm1117, %v1074, %v770
        %v1125 = vsel %vm1117, %v1076, %v772
        %v1127 = vsel %vm1117, %v1078, %v774
        %v1128 = vsel %vm1117, %v1079, %v772
        %v1129 = vsel %vm1117, %v1080, %v774
        %v1131 = vsel %vm1117, %v1082, %v776
        %v1133 = vsel %vm1117, %v1084, %v778
        %v1134 = vsel %vm1117, %v1085, %v776
        %v1135 = vsel %vm1117, %v1086, %v778
        %v1137 = vsel %vm1117, %v1088, %v780
        %v1139 = vsel %vm1117, %v1090, %v782
        %v1140 = vsel %vm1117, %v1091, %v780
        %v1141 = vsel %vm1117, %v1092, %v782
        %v1143 = vsel %vm1117, %v1094, %v784
        %v1145 = vsel %vm1117, %v1096, %v786
        %v1146 = vsel %vm1117, %v1097, %v784
        %v1147 = vsel %vm1117, %v1098, %v786
        %v1149 = vsel %vm1117, %v1100, %v788
        %v1151 = vsel %vm1117, %v1102, %v790
        %v1152 = vsel %vm1117, %v1103, %v788
        %v1153 = vsel %vm1117, %v1104, %v790
        %v1155 = vsel %vm1117, %v1106, %v792
        %v1157 = vsel %vm1117, %v1108, %v794
        %v1158 = vsel %vm1117, %v1109, %v792
        %v1159 = vsel %vm1117, %v1110, %v794
        %v1161 = vsel %vm1117, %v1112, %v796
        %v1163 = vsel %vm1117, %v1114, %v798
        %v1164 = vsel %vm1117, %v1115, %v796
        %v1165 = vsel %vm1117, %v1116, %v798
        %vm1166 = vcmask 195584
        %v1168 = vsel %vm1166, %v1119, %v810
        %v1170 = vsel %vm1166, %v1121, %v812
        %v1172 = vsel %vm1166, %v1122, %v814
        %v1174 = vsel %vm1166, %v1123, %v816
        %v1175 = vsel %vm1166, %v1125, %v814
        %v1176 = vsel %vm1166, %v1127, %v816
        %v1178 = vsel %vm1166, %v1128, %v818
        %v1180 = vsel %vm1166, %v1129, %v820
        %v1181 = vsel %vm1166, %v1131, %v818
        %v1182 = vsel %vm1166, %v1133, %v820
        %v1184 = vsel %vm1166, %v1134, %v822
        %v1186 = vsel %vm1166, %v1135, %v824
        %v1187 = vsel %vm1166, %v1137, %v822
        %v1188 = vsel %vm1166, %v1139, %v824
        %v1190 = vsel %vm1166, %v1140, %v826
        %v1192 = vsel %vm1166, %v1141, %v828
        %v1193 = vsel %vm1166, %v1143, %v826
        %v1194 = vsel %vm1166, %v1145, %v828
        %v1196 = vsel %vm1166, %v1146, %v830
        %v1198 = vsel %vm1166, %v1147, %v832
        %v1199 = vsel %vm1166, %v1149, %v830
        %v1200 = vsel %vm1166, %v1151, %v832
        %v1202 = vsel %vm1166, %v1152, %v834
        %v1204 = vsel %vm1166, %v1153, %v836
        %v1205 = vsel %vm1166, %v1155, %v834
        %v1206 = vsel %vm1166, %v1157, %v836
        %v1208 = vsel %vm1166, %v1158, %v838
        %v1210 = vsel %vm1166, %v1159, %v840
        %v1211 = vsel %vm1166, %v1161, %v838
        %v1212 = vsel %vm1166, %v1163, %v840
        %v1214 = vsel %vm1166, %v1164, %v842
        %v1216 = vsel %vm1166, %v1165, %v844
        %vm1217 = vcmask 228352
        %v1219 = vsel %vm1217, %v1168, %v869
        %v1221 = vsel %vm1217, %v1170, %v871
        %v1223 = vsel %vm1217, %v1172, %v873
        %v1225 = vsel %vm1217, %v1174, %v875
        %v1226 = vsel %vm1217, %v1175, %v873
        %v1227 = vsel %vm1217, %v1176, %v875
        %v1229 = vsel %vm1217, %v1178, %v877
        %v1231 = vsel %vm1217, %v1180, %v879
        %v1232 = vsel %vm1217, %v1181, %v877
        %v1233 = vsel %vm1217, %v1182, %v879
        %v1235 = vsel %vm1217, %v1184, %v881
        %v1237 = vsel %vm1217, %v1186, %v883
        %v1238 = vsel %vm1217, %v1187, %v881
        %v1239 = vsel %vm1217, %v1188, %v883
        %v1241 = vsel %vm1217, %v1190, %v885
        %v1243 = vsel %vm1217, %v1192, %v887
        %v1244 = vsel %vm1217, %v1193, %v885
        %v1245 = vsel %vm1217, %v1194, %v887
        %v1247 = vsel %vm1217, %v1196, %v889
        %v1249 = vsel %vm1217, %v1198, %v891
        %v1250 = vsel %vm1217, %v1199, %v889
        %v1251 = vsel %vm1217, %v1200, %v891
        %v1253 = vsel %vm1217, %v1202, %v893
        %v1255 = vsel %vm1217, %v1204, %v895
        %v1256 = vsel %vm1217, %v1205, %v893
        %v1257 = vsel %vm1217, %v1206, %v895
        %v1259 = vsel %vm1217, %v1208, %v897
        %v1261 = vsel %vm1217, %v1210, %v899
        %v1262 = vsel %vm1217, %v1211, %v897
        %v1263 = vsel %vm1217, %v1212, %v899
        %v1265 = vsel %vm1217, %v1214, %v901
        %v1267 = vsel %vm1217, %v1216, %v903
        %vm1268 = vcmask 261120
        %v1270 = vsel %vm1268, %v1219, %v910
        %v1272 = vsel %vm1268, %v1221, %v912
        %v1274 = vsel %vm1268, %v1223, %v914
        %v1276 = vsel %vm1268, %v1225, %v916
        %v1277 = vsel %vm1268, %v1226, %v914
        %v1278 = vsel %vm1268, %v1227, %v916
        %v1280 = vsel %vm1268, %v1229, %v918
        %v1282 = vsel %vm1268, %v1231, %v920
        %v1283 = vsel %vm1268, %v1232, %v918
        %v1284 = vsel %vm1268, %v1233, %v920
        %v1286 = vsel %vm1268, %v1235, %v922
        %v1288 = vsel %vm1268, %v1237, %v924
        %v1289 = vsel %vm1268, %v1238, %v922
        %v1290 = vsel %vm1268, %v1239, %v924
        %v1292 = vsel %vm1268, %v1241, %v926
        %v1294 = vsel %vm1268, %v1243, %v928
        %v1295 = vsel %vm1268, %v1244, %v926
        %v1296 = vsel %vm1268, %v1245, %v928
        %v1298 = vsel %vm1268, %v1247, %v930
        %v1300 = vsel %vm1268, %v1249, %v932
        %v1301 = vsel %vm1268, %v1250, %v930
        %v1302 = vsel %vm1268, %v1251, %v932
        %v1304 = vsel %vm1268, %v1253, %v934
        %v1306 = vsel %vm1268, %v1255, %v936
        %v1307 = vsel %vm1268, %v1256, %v934
        %v1308 = vsel %vm1268, %v1257, %v936
        %v1310 = vsel %vm1268, %v1259, %v938
        %v1312 = vsel %vm1268, %v1261, %v940
        %v1313 = vsel %vm1268, %v1262, %v938
        %v1314 = vsel %vm1268, %v1263, %v940
        %v1316 = vsel %vm1268, %v1265, %v942
        %v1318 = vsel %vm1268, %v1267, %v944
        %v1319 = vld [vmem:[#allocation5] sm:$0xf]
        %v1320 = vld [vmem:[#allocation5 + $0x4] sm:$0xf]
        %v1321 = vld [vmem:[#allocation5 + $0x8] sm:$0xf]
        %v1322 = vld [vmem:[#allocation5 + $0xc] sm:$0xf]
        %v1323 = vld [vmem:[#allocation5 + $0x10] sm:$0x3]
        %v1329 = vunpack.c.l.b16 %v1319
        %v1330 = vunpack.c.l.b16 %v1320
        %v1331 = vunpack.c.l.b16 %v1321
        %v1332 = vunpack.c.l.b16 %v1322
        %v1333 = vunpack.c.l.b16 %v1323
        %v1334 = vpack.c.b16 %v1330, %v1329
        %v1335 = vpack.c.b16 %v1332, %v1331
        %v1336 = vpack.c.b16 %v1333, %v1333
        %vm1339 = vcmask 293888
        %v1340 = vsel %vm1339, %v1270, 0
        %v1342 = vsel %vm1339, %v1272, 0
        %v1344 = vsel %vm1339, %v1274, 0
        %v1346 = vsel %vm1339, %v1276, 0
        %v1348 = vsel %vm1339, %v1277, 0
        %v1350 = vsel %vm1339, %v1278, 0
        %v1352 = vsel %vm1339, %v1280, 0
        %v1354 = vsel %vm1339, %v1282, 0
        %v1356 = vsel %vm1339, %v1283, 0
        %v1358 = vsel %vm1339, %v1284, 0
        %v1360 = vsel %vm1339, %v1286, 0
        %v1362 = vsel %vm1339, %v1288, 0
        %v1364 = vsel %vm1339, %v1289, 0
        %v1366 = vsel %vm1339, %v1290, 0
        %v1368 = vsel %vm1339, %v1292, 0
        %v1370 = vsel %vm1339, %v1294, 0
        %v1372 = vsel %vm1339, %v1295, 0
        %v1374 = vsel %vm1339, %v1296, 0
        %v1376 = vsel %vm1339, %v1298, 0
        %v1378 = vsel %vm1339, %v1300, 0
        %v1380 = vsel %vm1339, %v1301, 0
        %v1382 = vsel %vm1339, %v1302, 0
        %v1384 = vsel %vm1339, %v1304, 0
        %v1386 = vsel %vm1339, %v1306, 0
        %v1388 = vsel %vm1339, %v1307, 0
        %v1390 = vsel %vm1339, %v1308, 0
        %v1392 = vsel %vm1339, %v1310, 0
        %v1394 = vsel %vm1339, %v1312, 0
        %v1396 = vsel %vm1339, %v1313, 0
        %v1398 = vsel %vm1339, %v1314, 0
        %v1400 = vsel %vm1339, %v1316, 0
        %v1402 = vsel %vm1339, %v1318, 0
        %vm1404 = vcmask 1041408
        %v1406 = vsel %vm1404, %v1336, 0
        %1408 = vmatprep.subr.bf16.mxu0 0
        %1409 = vmatpush1.bf16.msra.mxu0 %v1334
        %1410 = vmatprep.subr.bf16.mxu0 0
        %1411 = vmatpush1.bf16.msra.mxu0 %v1335
        %1412 = vmatprep.subr.bf16.mxu0 0
        %1413 = vmatpush1.bf16.msra.mxu0 %v1406
        %1414 = vmatprep.subr.bf16.mxu0 0
        %1415 = vmatpush1.bf16.msra.mxu0 0
        %1416 = vmatprep.subr.bf16.mxu0 0
        %1417 = vmatpush1.bf16.msra.mxu0 0
        %1418 = vmatprep.subr.bf16.mxu0 0
        %1419 = vmatpush1.bf16.msra.mxu0 0
        %1420 = vmatprep.subr.bf16.mxu0 0
        %1421 = vmatpush1.bf16.msra.mxu0 0
        %1422 = vmatprep.subr.bf16.mxu0 0
        %1423 = vmatpush1.bf16.msra.mxu0 0
        %1424 = vmatprep.subr.bf16.mxu0 0
        %1425 = vmatpush1.bf16.msra.mxu0 0
        %1426 = vmatprep.subr.bf16.mxu0 0
        %1427 = vmatpush1.bf16.msra.mxu0 0
        %1428 = vmatprep.subr.bf16.mxu0 0
        %1429 = vmatpush1.bf16.msra.mxu0 0
        %1430 = vmatprep.subr.bf16.mxu0 0
        %1431 = vmatpush1.bf16.msra.mxu0 0
        %1432 = vmatprep.subr.bf16.mxu0 0
        %1433 = vmatpush1.bf16.msra.mxu0 0
        %1434 = vmatprep.subr.bf16.mxu0 0
        %1435 = vmatpush1.bf16.msra.mxu0 0
        %1436 = vmatprep.subr.bf16.mxu0 0
        %1437 = vmatpush1.bf16.msra.mxu0 0
        %1438 = vmatprep.subr.bf16.mxu0 0
        %1439 = vmatpush1.bf16.msra.mxu0 0
        %1440 = vmatprep.mubr.bf16.mxu0 0
        %1441 = vmatmul.mubr.bf16.gmra.mrb[0].mxu0 %v1340
        %v1442 = vpop.f32.mrb[0].mxu0
        %v1443 = vadd.f32 0.0, %v1442
        %v1444 = vpop.f32.mrb[0].mxu0
        %v1445 = vpop.f32.mrb[0].mxu0
        %v1446 = vadd.f32 0.0, %v1445
        %v1447 = vpop.f32.mrb[0].mxu0
        %1448 = vmatprep.mubr.bf16.mxu0 0
        %1449 = vmatmul.mubr.bf16.gmra.mrb[0].mxu0 %v1342
        %v1450 = vpop.f32.mrb[0].mxu0
        %v1451 = vadd.f32 0.0, %v1450
        %v1452 = vpop.f32.mrb[0].mxu0
        %v1453 = vpop.f32.mrb[0].mxu0
        %v1454 = vadd.f32 0.0, %v1453
        %v1455 = vpop.f32.mrb[0].mxu0
        %1456 = vmatprep.mubr.bf16.mxu0 0
        %1457 = vmatmul.mubr.bf16.gmra.mrb[0].mxu0 %v1344
        %v1458 = vpop.f32.mrb[0].mxu0
        %v1459 = vadd.f32 0.0, %v1458
        %v1460 = vpop.f32.mrb[0].mxu0
        %v1461 = vpop.f32.mrb[0].mxu0
        %v1462 = vadd.f32 0.0, %v1461
        %v1463 = vpop.f32.mrb[0].mxu0
        %1464 = vmatprep.mubr.bf16.mxu0 0
        %1465 = vmatmul.mubr.bf16.gmra.mrb[0].mxu0 %v1346
        %v1466 = vpop.f32.mrb[0].mxu0
        %v1467 = vadd.f32 0.0, %v1466
        %v1468 = vpop.f32.mrb[0].mxu0
        %v1469 = vpop.f32.mrb[0].mxu0
        %v1470 = vadd.f32 0.0, %v1469
        %v1471 = vpop.f32.mrb[0].mxu0
        %1472 = vmatprep.mubr.bf16.mxu0 0
        %1473 = vmatmul.mubr.bf16.gmra.mrb[0].mxu0 %v1348
        %v1474 = vpop.f32.mrb[0].mxu0
        %v1475 = vadd.f32 0.0, %v1474
        %v1476 = vpop.f32.mrb[0].mxu0
        %v1477 = vpop.f32.mrb[0].mxu0
        %v1478 = vadd.f32 0.0, %v1477
        %v1479 = vpop.f32.mrb[0].mxu0
        %1480 = vmatprep.mubr.bf16.mxu0 0
        %1481 = vmatmul.mubr.bf16.gmra.mrb[0].mxu0 %v1350
        %v1482 = vpop.f32.mrb[0].mxu0
        %v1483 = vadd.f32 0.0, %v1482
        %v1484 = vpop.f32.mrb[0].mxu0
        %v1485 = vpop.f32.mrb[0].mxu0
        %v1486 = vadd.f32 0.0, %v1485
        %v1487 = vpop.f32.mrb[0].mxu0
        %1488 = vmatprep.mubr.bf16.mxu0 0
        %1489 = vmatmul.mubr.bf16.gmra.mrb[0].mxu0 %v1352
        %v1490 = vpop.f32.mrb[0].mxu0
        %v1491 = vadd.f32 0.0, %v1490
        %v1492 = vpop.f32.mrb[0].mxu0
        %v1493 = vpop.f32.mrb[0].mxu0
        %v1494 = vadd.f32 0.0, %v1493
        %v1495 = vpop.f32.mrb[0].mxu0
        %1496 = vmatprep.mubr.bf16.mxu0 0
        %1497 = vmatmul.mubr.bf16.gmra.mrb[0].mxu0 %v1354
        %v1498 = vpop.f32.mrb[0].mxu0
        %v1499 = vadd.f32 0.0, %v1498
        %v1500 = vpop.f32.mrb[0].mxu0
        %v1501 = vpop.f32.mrb[0].mxu0
        %v1502 = vadd.f32 0.0, %v1501
        %v1503 = vpop.f32.mrb[0].mxu0
        %1504 = vmatprep.mubr.bf16.mxu0 0
        %1505 = vmatmul.mubr.bf16.gmra.mrb[0].mxu0 %v1356
        %v1506 = vpop.f32.mrb[0].mxu0
        %v1507 = vadd.f32 0.0, %v1506
        %v1508 = vpop.f32.mrb[0].mxu0
        %v1509 = vpop.f32.mrb[0].mxu0
        %v1510 = vadd.f32 0.0, %v1509
        %v1511 = vpop.f32.mrb[0].mxu0
        %1512 = vmatprep.mubr.bf16.mxu0 0
        %1513 = vmatmul.mubr.bf16.gmra.mrb[0].mxu0 %v1358
        %v1514 = vpop.f32.mrb[0].mxu0
        %v1515 = vadd.f32 0.0, %v1514
        %v1516 = vpop.f32.mrb[0].mxu0
        %v1517 = vpop.f32.mrb[0].mxu0
        %v1518 = vadd.f32 0.0, %v1517
        %v1519 = vpop.f32.mrb[0].mxu0
        %1520 = vmatprep.mubr.bf16.mxu0 0
        %1521 = vmatmul.mubr.bf16.gmra.mrb[0].mxu0 %v1360
        %v1522 = vpop.f32.mrb[0].mxu0
        %v1523 = vadd.f32 0.0, %v1522
        %v1524 = vpop.f32.mrb[0].mxu0
        %v1525 = vpop.f32.mrb[0].mxu0
        %v1526 = vadd.f32 0.0, %v1525
        %v1527 = vpop.f32.mrb[0].mxu0
        %1528 = vmatprep.mubr.bf16.mxu0 0
        %1529 = vmatmul.mubr.bf16.gmra.mrb[0].mxu0 %v1362
        %v1530 = vpop.f32.mrb[0].mxu0
        %v1531 = vadd.f32 0.0, %v1530
        %v1532 = vpop.f32.mrb[0].mxu0
        %v1533 = vpop.f32.mrb[0].mxu0
        %v1534 = vadd.f32 0.0, %v1533
        %v1535 = vpop.f32.mrb[0].mxu0
        %1536 = vmatprep.mubr.bf16.mxu0 0
        %1537 = vmatmul.mubr.bf16.gmra.mrb[0].mxu0 %v1364
        %v1538 = vpop.f32.mrb[0].mxu0
        %v1539 = vadd.f32 0.0, %v1538
        %v1540 = vpop.f32.mrb[0].mxu0
        %v1541 = vpop.f32.mrb[0].mxu0
        %v1542 = vadd.f32 0.0, %v1541
        %v1543 = vpop.f32.mrb[0].mxu0
        %1544 = vmatprep.mubr.bf16.mxu0 0
        %1545 = vmatmul.mubr.bf16.gmra.mrb[0].mxu0 %v1366
        %v1546 = vpop.f32.mrb[0].mxu0
        %v1547 = vadd.f32 0.0, %v1546
        %v1548 = vpop.f32.mrb[0].mxu0
        %v1549 = vpop.f32.mrb[0].mxu0
        %v1550 = vadd.f32 0.0, %v1549
        %v1551 = vpop.f32.mrb[0].mxu0
        %1552 = vmatprep.mubr.bf16.mxu0 0
        %1553 = vmatmul.mubr.bf16.gmra.mrb[0].mxu0 %v1368
        %v1554 = vpop.f32.mrb[0].mxu0
        %v1555 = vadd.f32 0.0, %v1554
        %v1556 = vpop.f32.mrb[0].mxu0
        %v1557 = vpop.f32.mrb[0].mxu0
        %v1558 = vadd.f32 0.0, %v1557
        %v1559 = vpop.f32.mrb[0].mxu0
        %1560 = vmatprep.mubr.bf16.mxu0 0
        %1561 = vmatmul.mubr.bf16.gmra.mrb[0].mxu0 %v1370
        %v1562 = vpop.f32.mrb[0].mxu0
        %v1563 = vadd.f32 0.0, %v1562
        %v1564 = vpop.f32.mrb[0].mxu0
        %v1565 = vpop.f32.mrb[0].mxu0
        %v1566 = vadd.f32 0.0, %v1565
        %v1567 = vpop.f32.mrb[0].mxu0
        %1568 = vmatprep.mubr.bf16.mxu0 0
        %1569 = vmatmul.mubr.bf16.gmra.mrb[0].mxu0 %v1372
        %v1570 = vpop.f32.mrb[0].mxu0
        %v1571 = vadd.f32 0.0, %v1570
        %v1572 = vpop.f32.mrb[0].mxu0
        %v1573 = vpop.f32.mrb[0].mxu0
        %v1574 = vadd.f32 0.0, %v1573
        %v1575 = vpop.f32.mrb[0].mxu0
        %1576 = vmatprep.mubr.bf16.mxu0 0
        %1577 = vmatmul.mubr.bf16.gmra.mrb[0].mxu0 %v1374
        %v1578 = vpop.f32.mrb[0].mxu0
        %v1579 = vadd.f32 0.0, %v1578
        %v1580 = vpop.f32.mrb[0].mxu0
        %v1581 = vpop.f32.mrb[0].mxu0
        %v1582 = vadd.f32 0.0, %v1581
        %v1583 = vpop.f32.mrb[0].mxu0
        %1584 = vmatprep.mubr.bf16.mxu0 0
        %1585 = vmatmul.mubr.bf16.gmra.mrb[0].mxu0 %v1376
        %v1586 = vpop.f32.mrb[0].mxu0
        %v1587 = vadd.f32 0.0, %v1586
        %v1588 = vpop.f32.mrb[0].mxu0
        %v1589 = vpop.f32.mrb[0].mxu0
        %v1590 = vadd.f32 0.0, %v1589
        %v1591 = vpop.f32.mrb[0].mxu0
        %1592 = vmatprep.mubr.bf16.mxu0 0
        %1593 = vmatmul.mubr.bf16.gmra.mrb[0].mxu0 %v1378
        %v1594 = vpop.f32.mrb[0].mxu0
        %v1595 = vadd.f32 0.0, %v1594
        %v1596 = vpop.f32.mrb[0].mxu0
        %v1597 = vpop.f32.mrb[0].mxu0
        %v1598 = vadd.f32 0.0, %v1597
        %v1599 = vpop.f32.mrb[0].mxu0
        %1600 = vmatprep.mubr.bf16.mxu0 0
        %1601 = vmatmul.mubr.bf16.gmra.mrb[0].mxu0 %v1380
        %v1602 = vpop.f32.mrb[0].mxu0
        %v1603 = vadd.f32 0.0, %v1602
        %v1604 = vpop.f32.mrb[0].mxu0
        %v1605 = vpop.f32.mrb[0].mxu0
        %v1606 = vadd.f32 0.0, %v1605
        %v1607 = vpop.f32.mrb[0].mxu0
        %1608 = vmatprep.mubr.bf16.mxu0 0
        %1609 = vmatmul.mubr.bf16.gmra.mrb[0].mxu0 %v1382
        %v1610 = vpop.f32.mrb[0].mxu0
        %v1611 = vadd.f32 0.0, %v1610
        %v1612 = vpop.f32.mrb[0].mxu0
        %v1613 = vpop.f32.mrb[0].mxu0
        %v1614 = vadd.f32 0.0, %v1613
        %v1615 = vpop.f32.mrb[0].mxu0
        %1616 = vmatprep.mubr.bf16.mxu0 0
        %1617 = vmatmul.mubr.bf16.gmra.mrb[0].mxu0 %v1384
        %v1618 = vpop.f32.mrb[0].mxu0
        %v1619 = vadd.f32 0.0, %v1618
        %v1620 = vpop.f32.mrb[0].mxu0
        %v1621 = vpop.f32.mrb[0].mxu0
        %v1622 = vadd.f32 0.0, %v1621
        %v1623 = vpop.f32.mrb[0].mxu0
        %1624 = vmatprep.mubr.bf16.mxu0 0
        %1625 = vmatmul.mubr.bf16.gmra.mrb[0].mxu0 %v1386
        %v1626 = vpop.f32.mrb[0].mxu0
        %v1627 = vadd.f32 0.0, %v1626
        %v1628 = vpop.f32.mrb[0].mxu0
        %v1629 = vpop.f32.mrb[0].mxu0
        %v1630 = vadd.f32 0.0, %v1629
        %v1631 = vpop.f32.mrb[0].mxu0
        %1632 = vmatprep.mubr.bf16.mxu0 0
        %1633 = vmatmul.mubr.bf16.gmra.mrb[0].mxu0 %v1388
        %v1634 = vpop.f32.mrb[0].mxu0
        %v1635 = vadd.f32 0.0, %v1634
        %v1636 = vpop.f32.mrb[0].mxu0
        %v1637 = vpop.f32.mrb[0].mxu0
        %v1638 = vadd.f32 0.0, %v1637
        %v1639 = vpop.f32.mrb[0].mxu0
        %1640 = vmatprep.mubr.bf16.mxu0 0
        %1641 = vmatmul.mubr.bf16.gmra.mrb[0].mxu0 %v1390
        %v1642 = vpop.f32.mrb[0].mxu0
        %v1643 = vadd.f32 0.0, %v1642
        %v1644 = vpop.f32.mrb[0].mxu0
        %v1645 = vpop.f32.mrb[0].mxu0
        %v1646 = vadd.f32 0.0, %v1645
        %v1647 = vpop.f32.mrb[0].mxu0
        %1648 = vmatprep.mubr.bf16.mxu0 0
        %1649 = vmatmul.mubr.bf16.gmra.mrb[0].mxu0 %v1392
        %v1650 = vpop.f32.mrb[0].mxu0
        %v1651 = vadd.f32 0.0, %v1650
        %v1652 = vpop.f32.mrb[0].mxu0
        %v1653 = vpop.f32.mrb[0].mxu0
        %v1654 = vadd.f32 0.0, %v1653
        %v1655 = vpop.f32.mrb[0].mxu0
        %1656 = vmatprep.mubr.bf16.mxu0 0
        %1657 = vmatmul.mubr.bf16.gmra.mrb[0].mxu0 %v1394
        %v1658 = vpop.f32.mrb[0].mxu0
        %v1659 = vadd.f32 0.0, %v1658
        %v1660 = vpop.f32.mrb[0].mxu0
        %v1661 = vpop.f32.mrb[0].mxu0
        %v1662 = vadd.f32 0.0, %v1661
        %v1663 = vpop.f32.mrb[0].mxu0
        %1664 = vmatprep.mubr.bf16.mxu0 0
        %1665 = vmatmul.mubr.bf16.gmra.mrb[0].mxu0 %v1396
        %v1666 = vpop.f32.mrb[0].mxu0
        %v1667 = vadd.f32 0.0, %v1666
        %v1668 = vpop.f32.mrb[0].mxu0
        %v1669 = vpop.f32.mrb[0].mxu0
        %v1670 = vadd.f32 0.0, %v1669
        %v1671 = vpop.f32.mrb[0].mxu0
        %1672 = vmatprep.mubr.bf16.mxu0 0
        %1673 = vmatmul.mubr.bf16.gmra.mrb[0].mxu0 %v1398
        %v1674 = vpop.f32.mrb[0].mxu0
        %v1675 = vadd.f32 0.0, %v1674
        %v1676 = vpop.f32.mrb[0].mxu0
        %v1677 = vpop.f32.mrb[0].mxu0
        %v1678 = vadd.f32 0.0, %v1677
        %v1679 = vpop.f32.mrb[0].mxu0
        %1680 = vmatprep.mubr.bf16.mxu0 0
        %1681 = vmatmul.mubr.bf16.gmra.mrb[0].mxu0 %v1400
        %v1682 = vpop.f32.mrb[0].mxu0
        %v1683 = vadd.f32 0.0, %v1682
        %v1684 = vpop.f32.mrb[0].mxu0
        %v1685 = vpop.f32.mrb[0].mxu0
        %v1686 = vadd.f32 0.0, %v1685
        %v1687 = vpop.f32.mrb[0].mxu0
        %1688 = vmatprep.mubr.bf16.mxu0 0
        %1689 = vmatmul.mubr.bf16.gmra.mrb[0].mxu0 %v1402
        %v1690 = vpop.f32.mrb[0].mxu0
        %v1691 = vadd.f32 0.0, %v1690
        %v1692 = vpop.f32.mrb[0].mxu0
        %v1693 = vpop.f32.mrb[0].mxu0
        %v1694 = vadd.f32 0.0, %v1693
        %v1695 = vpop.f32.mrb[0].mxu0
        %1696 = vdwg.mxu0
        %v1697 = vpack.c.bf16 %v1446, %v1443
        %v1698 = vpack.c.bf16 %v1454, %v1451
        %v1699 = vpack.c.bf16 %v1462, %v1459
        %v1700 = vpack.c.bf16 %v1470, %v1467
        %v1701 = vpack.c.bf16 %v1478, %v1475
        %v1702 = vpack.c.bf16 %v1486, %v1483
        %v1703 = vpack.c.bf16 %v1494, %v1491
        %v1704 = vpack.c.bf16 %v1502, %v1499
        %v1705 = vpack.c.bf16 %v1510, %v1507
        %v1706 = vpack.c.bf16 %v1518, %v1515
        %v1707 = vpack.c.bf16 %v1526, %v1523
        %v1708 = vpack.c.bf16 %v1534, %v1531
        %v1709 = vpack.c.bf16 %v1542, %v1539
        %v1710 = vpack.c.bf16 %v1550, %v1547
        %v1711 = vpack.c.bf16 %v1558, %v1555
        %v1712 = vpack.c.bf16 %v1566, %v1563
        %v1713 = vpack.c.bf16 %v1574, %v1571
        %v1714 = vpack.c.bf16 %v1582, %v1579
        %v1715 = vpack.c.bf16 %v1590, %v1587
        %v1716 = vpack.c.bf16 %v1598, %v1595
        %v1717 = vpack.c.bf16 %v1606, %v1603
        %v1718 = vpack.c.bf16 %v1614, %v1611
        %v1719 = vpack.c.bf16 %v1622, %v1619
        %v1720 = vpack.c.bf16 %v1630, %v1627
        %v1721 = vpack.c.bf16 %v1638, %v1635
        %v1722 = vpack.c.bf16 %v1646, %v1643
        %v1723 = vpack.c.bf16 %v1654, %v1651
        %v1724 = vpack.c.bf16 %v1662, %v1659
        %v1725 = vpack.c.bf16 %v1670, %v1667
        %v1726 = vpack.c.bf16 %v1678, %v1675
        %v1727 = vpack.c.bf16 %v1686, %v1683
        %v1728 = vpack.c.bf16 %v1694, %v1691
        %v1761 = vunpack.c.l.b16 %v1697
        %v1762 = vunpack.c.h.b16 %v1697
        %v1763 = vunpack.c.l.b16 %v1698
        %v1764 = vunpack.c.h.b16 %v1698
        %v1765 = vunpack.c.l.b16 %v1699
        %v1766 = vunpack.c.h.b16 %v1699
        %v1767 = vunpack.c.l.b16 %v1700
        %v1768 = vunpack.c.h.b16 %v1700
        %v1769 = vunpack.c.l.b16 %v1701
        %v1770 = vunpack.c.h.b16 %v1701
        %v1771 = vunpack.c.l.b16 %v1702
        %v1772 = vunpack.c.h.b16 %v1702
        %v1773 = vunpack.c.l.b16 %v1703
        %v1774 = vunpack.c.h.b16 %v1703
        %v1775 = vunpack.c.l.b16 %v1704
        %v1776 = vunpack.c.h.b16 %v1704
        %v1777 = vunpack.c.l.b16 %v1705
        %v1778 = vunpack.c.h.b16 %v1705
        %v1779 = vunpack.c.l.b16 %v1706
        %v1780 = vunpack.c.h.b16 %v1706
        %v1781 = vunpack.c.l.b16 %v1707
        %v1782 = vunpack.c.h.b16 %v1707
        %v1783 = vunpack.c.l.b16 %v1708
        %v1784 = vunpack.c.h.b16 %v1708
        %v1785 = vunpack.c.l.b16 %v1709
        %v1786 = vunpack.c.h.b16 %v1709
        %v1787 = vunpack.c.l.b16 %v1710
        %v1788 = vunpack.c.h.b16 %v1710
        %v1789 = vunpack.c.l.b16 %v1711
        %v1790 = vunpack.c.h.b16 %v1711
        %v1791 = vunpack.c.l.b16 %v1712
        %v1792 = vunpack.c.h.b16 %v1712
        %v1793 = vunpack.c.l.b16 %v1713
        %v1794 = vunpack.c.h.b16 %v1713
        %v1795 = vunpack.c.l.b16 %v1714
        %v1796 = vunpack.c.h.b16 %v1714
        %v1797 = vunpack.c.l.b16 %v1715
        %v1798 = vunpack.c.h.b16 %v1715
        %v1799 = vunpack.c.l.b16 %v1716
        %v1800 = vunpack.c.h.b16 %v1716
        %v1801 = vunpack.c.l.b16 %v1717
        %v1802 = vunpack.c.h.b16 %v1717
        %v1803 = vunpack.c.l.b16 %v1718
        %v1804 = vunpack.c.h.b16 %v1718
        %v1805 = vunpack.c.l.b16 %v1719
        %v1806 = vunpack.c.h.b16 %v1719
        %v1807 = vunpack.c.l.b16 %v1720
        %v1808 = vunpack.c.h.b16 %v1720
        %v1809 = vunpack.c.l.b16 %v1721
        %v1810 = vunpack.c.h.b16 %v1721
        %v1811 = vunpack.c.l.b16 %v1722
        %v1812 = vunpack.c.h.b16 %v1722
        %v1813 = vunpack.c.l.b16 %v1723
        %v1814 = vunpack.c.h.b16 %v1723
        %v1815 = vunpack.c.l.b16 %v1724
        %v1816 = vunpack.c.h.b16 %v1724
        %v1817 = vunpack.c.l.b16 %v1725
        %v1818 = vunpack.c.h.b16 %v1725
        %v1819 = vunpack.c.l.b16 %v1726
        %v1820 = vunpack.c.h.b16 %v1726
        %v1821 = vunpack.c.l.b16 %v1727
        %v1822 = vunpack.c.h.b16 %v1727
        %v1823 = vunpack.c.l.b16 %v1728
        %v1824 = vunpack.c.h.b16 %v1728
        %v1825 = vpack.c.b16 %v1761, %v1761
        %v1826 = vpack.c.b16 %v1762, %v1762
        %v1827 = vpack.c.b16 %v1763, %v1763
        %v1828 = vpack.c.b16 %v1764, %v1764
        %v1829 = vpack.c.b16 %v1765, %v1765
        %v1830 = vpack.c.b16 %v1766, %v1766
        %v1831 = vpack.c.b16 %v1767, %v1767
        %v1832 = vpack.c.b16 %v1768, %v1768
        %v1833 = vpack.c.b16 %v1769, %v1769
        %v1834 = vpack.c.b16 %v1770, %v1770
        %v1835 = vpack.c.b16 %v1771, %v1771
        %v1836 = vpack.c.b16 %v1772, %v1772
        %v1837 = vpack.c.b16 %v1773, %v1773
        %v1838 = vpack.c.b16 %v1774, %v1774
        %v1839 = vpack.c.b16 %v1775, %v1775
        %v1840 = vpack.c.b16 %v1776, %v1776
        %v1841 = vpack.c.b16 %v1777, %v1777
        %v1842 = vpack.c.b16 %v1778, %v1778
        %v1843 = vpack.c.b16 %v1779, %v1779
        %v1844 = vpack.c.b16 %v1780, %v1780
        %v1845 = vpack.c.b16 %v1781, %v1781
        %v1846 = vpack.c.b16 %v1782, %v1782
        %v1847 = vpack.c.b16 %v1783, %v1783
        %v1848 = vpack.c.b16 %v1784, %v1784
        %v1849 = vpack.c.b16 %v1785, %v1785
        %v1850 = vpack.c.b16 %v1786, %v1786
        %v1851 = vpack.c.b16 %v1787, %v1787
        %v1852 = vpack.c.b16 %v1788, %v1788
        %v1853 = vpack.c.b16 %v1789, %v1789
        %v1854 = vpack.c.b16 %v1790, %v1790
        %v1855 = vpack.c.b16 %v1791, %v1791
        %v1856 = vpack.c.b16 %v1792, %v1792
        %v1857 = vpack.c.b16 %v1793, %v1793
        %v1858 = vpack.c.b16 %v1794, %v1794
        %v1859 = vpack.c.b16 %v1795, %v1795
        %v1860 = vpack.c.b16 %v1796, %v1796
        %v1861 = vpack.c.b16 %v1797, %v1797
        %v1862 = vpack.c.b16 %v1798, %v1798
        %v1863 = vpack.c.b16 %v1799, %v1799
        %v1864 = vpack.c.b16 %v1800, %v1800
        %v1865 = vpack.c.b16 %v1801, %v1801
        %v1866 = vpack.c.b16 %v1802, %v1802
        %v1867 = vpack.c.b16 %v1803, %v1803
        %v1868 = vpack.c.b16 %v1804, %v1804
        %v1869 = vpack.c.b16 %v1805, %v1805
        %v1870 = vpack.c.b16 %v1806, %v1806
        %v1871 = vpack.c.b16 %v1807, %v1807
        %v1872 = vpack.c.b16 %v1808, %v1808
        %v1873 = vpack.c.b16 %v1809, %v1809
        %v1874 = vpack.c.b16 %v1810, %v1810
        %v1875 = vpack.c.b16 %v1811, %v1811
        %v1876 = vpack.c.b16 %v1812, %v1812
        %v1877 = vpack.c.b16 %v1813, %v1813
        %v1878 = vpack.c.b16 %v1814, %v1814
        %v1879 = vpack.c.b16 %v1815, %v1815
        %v1880 = vpack.c.b16 %v1816, %v1816
        %v1881 = vpack.c.b16 %v1817, %v1817
        %v1882 = vpack.c.b16 %v1818, %v1818
        %v1883 = vpack.c.b16 %v1819, %v1819
        %v1884 = vpack.c.b16 %v1820, %v1820
        %v1885 = vpack.c.b16 %v1821, %v1821
        %v1886 = vpack.c.b16 %v1822, %v1822
        %v1887 = vpack.c.b16 %v1823, %v1823
        %v1888 = vpack.c.b16 %v1824, %v1824
        %vm1953 = vcmask 60416
        %1954 = vst.msk [vmem:[%s227] sm:$0xf] %vm1953, %v1825
        %1955 = vst.msk [vmem:[%s227 + $0x4] sm:$0xf] %vm1953, %v1826
        %1956 = vst.msk [vmem:[%s227 + $0x8] sm:$0xf] %vm1953, %v1827
        %1957 = vst.msk [vmem:[%s227 + $0xc] sm:$0xf] %vm1953, %v1828
        %1958 = vst.msk [vmem:[%s227 + $0x10] sm:$0xf] %vm1953, %v1829
        %1959 = vst.msk [vmem:[%s227 + $0x14] sm:$0xf] %vm1953, %v1830
        %1960 = vst.msk [vmem:[%s227 + $0x18] sm:$0xf] %vm1953, %v1831
        %1961 = vst.msk [vmem:[%s227 + $0x1c] sm:$0xf] %vm1953, %v1832
        %1962 = vst.msk [vmem:[%s227 + $0x20] sm:$0xf] %vm1953, %v1833
        %1963 = vst.msk [vmem:[%s227 + $0x24] sm:$0xf] %vm1953, %v1834
        %1964 = vst.msk [vmem:[%s227 + $0x28] sm:$0xf] %vm1953, %v1835
        %1965 = vst.msk [vmem:[%s227 + $0x2c] sm:$0xf] %vm1953, %v1836
        %1966 = vst.msk [vmem:[%s227 + $0x30] sm:$0xf] %vm1953, %v1837
        %1967 = vst.msk [vmem:[%s227 + $0x34] sm:$0xf] %vm1953, %v1838
        %1968 = vst.msk [vmem:[%s227 + $0x38] sm:$0xf] %vm1953, %v1839
        %1969 = vst.msk [vmem:[%s227 + $0x3c] sm:$0xf] %vm1953, %v1840
        %1970 = vst.msk [vmem:[%s227 + $0x40] sm:$0xf] %vm1953, %v1841
        %1971 = vst.msk [vmem:[%s227 + $0x44] sm:$0xf] %vm1953, %v1842
        %1972 = vst.msk [vmem:[%s227 + $0x48] sm:$0xf] %vm1953, %v1843
        %1973 = vst.msk [vmem:[%s227 + $0x4c] sm:$0xf] %vm1953, %v1844
        %1974 = vst.msk [vmem:[%s227 + $0x50] sm:$0xf] %vm1953, %v1845
        %1975 = vst.msk [vmem:[%s227 + $0x54] sm:$0xf] %vm1953, %v1846
        %1976 = vst.msk [vmem:[%s227 + $0x58] sm:$0xf] %vm1953, %v1847
        %1977 = vst.msk [vmem:[%s227 + $0x5c] sm:$0xf] %vm1953, %v1848
        %1978 = vst.msk [vmem:[%s227 + $0x60] sm:$0xf] %vm1953, %v1849
        %1979 = vst.msk [vmem:[%s227 + $0x64] sm:$0xf] %vm1953, %v1850
        %1980 = vst.msk [vmem:[%s227 + $0x68] sm:$0xf] %vm1953, %v1851
        %1981 = vst.msk [vmem:[%s227 + $0x6c] sm:$0xf] %vm1953, %v1852
        %1982 = vst.msk [vmem:[%s227 + $0x70] sm:$0xf] %vm1953, %v1853
        %1983 = vst.msk [vmem:[%s227 + $0x74] sm:$0xf] %vm1953, %v1854
        %1984 = vst.msk [vmem:[%s227 + $0x78] sm:$0xf] %vm1953, %v1855
        %1985 = vst.msk [vmem:[%s227 + $0x7c] sm:$0xf] %vm1953, %v1856
        %1986 = vst.msk [vmem:[%s227 + $0x80] sm:$0xf] %vm1953, %v1857
        %1987 = vst.msk [vmem:[%s227 + $0x84] sm:$0xf] %vm1953, %v1858
        %1988 = vst.msk [vmem:[%s227 + $0x88] sm:$0xf] %vm1953, %v1859
        %1989 = vst.msk [vmem:[%s227 + $0x8c] sm:$0xf] %vm1953, %v1860
        %1990 = vst.msk [vmem:[%s227 + $0x90] sm:$0xf] %vm1953, %v1861
        %1991 = vst.msk [vmem:[%s227 + $0x94] sm:$0xf] %vm1953, %v1862
        %1992 = vst.msk [vmem:[%s227 + $0x98] sm:$0xf] %vm1953, %v1863
        %1993 = vst.msk [vmem:[%s227 + $0x9c] sm:$0xf] %vm1953, %v1864
        %1994 = vst.msk [vmem:[%s227 + $0xa0] sm:$0xf] %vm1953, %v1865
        %1995 = vst.msk [vmem:[%s227 + $0xa4] sm:$0xf] %vm1953, %v1866
        %1996 = vst.msk [vmem:[%s227 + $0xa8] sm:$0xf] %vm1953, %v1867
        %1997 = vst.msk [vmem:[%s227 + $0xac] sm:$0xf] %vm1953, %v1868
        %1998 = vst.msk [vmem:[%s227 + $0xb0] sm:$0xf] %vm1953, %v1869
        %1999 = vst.msk [vmem:[%s227 + $0xb4] sm:$0xf] %vm1953, %v1870
        %2000 = vst.msk [vmem:[%s227 + $0xb8] sm:$0xf] %vm1953, %v1871
        %2001 = vst.msk [vmem:[%s227 + $0xbc] sm:$0xf] %vm1953, %v1872
        %2002 = vst.msk [vmem:[%s227 + $0xc0] sm:$0xf] %vm1953, %v1873
        %2003 = vst.msk [vmem:[%s227 + $0xc4] sm:$0xf] %vm1953, %v1874
        %2004 = vst.msk [vmem:[%s227 + $0xc8] sm:$0xf] %vm1953, %v1875
        %2005 = vst.msk [vmem:[%s227 + $0xcc] sm:$0xf] %vm1953, %v1876
        %2006 = vst.msk [vmem:[%s227 + $0xd0] sm:$0xf] %vm1953, %v1877
        %2007 = vst.msk [vmem:[%s227 + $0xd4] sm:$0xf] %vm1953, %v1878
        %2008 = vst.msk [vmem:[%s227 + $0xd8] sm:$0xf] %vm1953, %v1879
        %2009 = vst.msk [vmem:[%s227 + $0xdc] sm:$0xf] %vm1953, %v1880
        %2010 = vst.msk [vmem:[%s227 + $0xe0] sm:$0xf] %vm1953, %v1881
        %2011 = vst.msk [vmem:[%s227 + $0xe4] sm:$0xf] %vm1953, %v1882
        %2012 = vst.msk [vmem:[%s227 + $0xe8] sm:$0xf] %vm1953, %v1883
        %2013 = vst.msk [vmem:[%s227 + $0xec] sm:$0xf] %vm1953, %v1884
        %2014 = vst.msk [vmem:[%s227 + $0xf0] sm:$0xf] %vm1953, %v1885
        %2015 = vst.msk [vmem:[%s227 + $0xf4] sm:$0xf] %vm1953, %v1886
        %2016 = vst.msk [vmem:[%s227 + $0xf8] sm:$0xf] %vm1953, %v1887
        %2017 = vst.msk [vmem:[%s227 + $0xfc] sm:$0xf] %vm1953, %v1888
        %v2018 = vsel %vm982, %v1443, 0.0
        %v2019 = vsel %vm982, %v1446, 0.0
        %v2020 = vadd.f32 %v2018, %v2019
        %v2021 = vsel %vm982, %v1451, 0.0
        %v2022 = vadd.f32 %v2020, %v2021
        %v2023 = vsel %vm982, %v1454, 0.0
        %v2024 = vadd.f32 %v2022, %v2023
        %v2025 = vsel %vm982, %v1459, 0.0
        %v2026 = vadd.f32 %v2024, %v2025
        %v2027 = vsel %vm982, %v1462, 0.0
        %v2028 = vadd.f32 %v2026, %v2027
        %v2029 = vsel %vm982, %v1467, 0.0
        %v2030 = vadd.f32 %v2028, %v2029
        %v2031 = vsel %vm982, %v1470, 0.0
        %v2032 = vadd.f32 %v2030, %v2031
        %v2033 = vsel %vm982, %v1475, 0.0
        %v2034 = vadd.f32 %v2032, %v2033
        %v2035 = vsel %vm982, %v1478, 0.0
        %v2036 = vadd.f32 %v2034, %v2035
        %v2037 = vsel %vm982, %v1483, 0.0
        %v2038 = vadd.f32 %v2036, %v2037
        %v2039 = vsel %vm982, %v1486, 0.0
        %v2040 = vadd.f32 %v2038, %v2039
        %v2041 = vsel %vm982, %v1491, 0.0
        %v2042 = vadd.f32 %v2040, %v2041
        %v2043 = vsel %vm982, %v1494, 0.0
        %v2044 = vadd.f32 %v2042, %v2043
        %v2045 = vsel %vm982, %v1499, 0.0
        %v2046 = vadd.f32 %v2044, %v2045
        %v2047 = vsel %vm982, %v1502, 0.0
        %v2048 = vadd.f32 %v2046, %v2047
        %v2049 = vsel %vm982, %v1507, 0.0
        %v2050 = vadd.f32 %v2048, %v2049
        %v2051 = vsel %vm982, %v1510, 0.0
        %v2052 = vadd.f32 %v2050, %v2051
        %v2053 = vsel %vm982, %v1515, 0.0
        %v2054 = vadd.f32 %v2052, %v2053
        %v2055 = vsel %vm982, %v1518, 0.0
        %v2056 = vadd.f32 %v2054, %v2055
        %v2057 = vsel %vm982, %v1523, 0.0
        %v2058 = vadd.f32 %v2056, %v2057
        %v2059 = vsel %vm982, %v1526, 0.0
        %v2060 = vadd.f32 %v2058, %v2059
        %v2061 = vsel %vm982, %v1531, 0.0
        %v2062 = vadd.f32 %v2060, %v2061
        %v2063 = vsel %vm982, %v1534, 0.0
        %v2064 = vadd.f32 %v2062, %v2063
        %v2065 = vsel %vm982, %v1539, 0.0
        %v2066 = vadd.f32 %v2064, %v2065
        %v2067 = vsel %vm982, %v1542, 0.0
        %v2068 = vadd.f32 %v2066, %v2067
        %v2069 = vsel %vm982, %v1547, 0.0
        %v2070 = vadd.f32 %v2068, %v2069
        %v2071 = vsel %vm982, %v1550, 0.0
        %v2072 = vadd.f32 %v2070, %v2071
        %v2073 = vsel %vm982, %v1555, 0.0
        %v2074 = vadd.f32 %v2072, %v2073
        %v2075 = vsel %vm982, %v1558, 0.0
        %v2076 = vadd.f32 %v2074, %v2075
        %v2077 = vsel %vm982, %v1563, 0.0
        %v2078 = vadd.f32 %v2076, %v2077
        %v2079 = vsel %vm982, %v1566, 0.0
        %v2080 = vadd.f32 %v2078, %v2079
        %v2081 = vsel %vm982, %v1571, 0.0
        %v2082 = vadd.f32 %v2080, %v2081
        %v2083 = vsel %vm982, %v1574, 0.0
        %v2084 = vadd.f32 %v2082, %v2083
        %v2085 = vsel %vm982, %v1579, 0.0
        %v2086 = vadd.f32 %v2084, %v2085
        %v2087 = vsel %vm982, %v1582, 0.0
        %v2088 = vadd.f32 %v2086, %v2087
        %v2089 = vsel %vm982, %v1587, 0.0
        %v2090 = vadd.f32 %v2088, %v2089
        %v2091 = vsel %vm982, %v1590, 0.0
        %v2092 = vadd.f32 %v2090, %v2091
        %v2093 = vsel %vm982, %v1595, 0.0
        %v2094 = vadd.f32 %v2092, %v2093
        %v2095 = vsel %vm982, %v1598, 0.0
        %v2096 = vadd.f32 %v2094, %v2095
        %v2097 = vsel %vm982, %v1603, 0.0
        %v2098 = vadd.f32 %v2096, %v2097
        %v2099 = vsel %vm982, %v1606, 0.0
        %v2100 = vadd.f32 %v2098, %v2099
        %v2101 = vsel %vm982, %v1611, 0.0
        %v2102 = vadd.f32 %v2100, %v2101
        %v2103 = vsel %vm982, %v1614, 0.0
        %v2104 = vadd.f32 %v2102, %v2103
        %v2105 = vsel %vm982, %v1619, 0.0
        %v2106 = vadd.f32 %v2104, %v2105
        %v2107 = vsel %vm982, %v1622, 0.0
        %v2108 = vadd.f32 %v2106, %v2107
        %v2109 = vsel %vm982, %v1627, 0.0
        %v2110 = vadd.f32 %v2108, %v2109
        %v2111 = vsel %vm982, %v1630, 0.0
        %v2112 = vadd.f32 %v2110, %v2111
        %v2113 = vsel %vm982, %v1635, 0.0
        %v2114 = vadd.f32 %v2112, %v2113
        %v2115 = vsel %vm982, %v1638, 0.0
        %v2116 = vadd.f32 %v2114, %v2115
        %v2117 = vsel %vm982, %v1643, 0.0
        %v2118 = vadd.f32 %v2116, %v2117
        %v2119 = vsel %vm982, %v1646, 0.0
        %v2120 = vadd.f32 %v2118, %v2119
        %v2121 = vsel %vm982, %v1651, 0.0
        %v2122 = vadd.f32 %v2120, %v2121
        %v2123 = vsel %vm982, %v1654, 0.0
        %v2124 = vadd.f32 %v2122, %v2123
        %v2125 = vsel %vm982, %v1659, 0.0
        %v2126 = vadd.f32 %v2124, %v2125
        %v2127 = vsel %vm982, %v1662, 0.0
        %v2128 = vadd.f32 %v2126, %v2127
        %v2129 = vsel %vm982, %v1667, 0.0
        %v2130 = vadd.f32 %v2128, %v2129
        %v2131 = vsel %vm982, %v1670, 0.0
        %v2132 = vadd.f32 %v2130, %v2131
        %v2133 = vsel %vm982, %v1675, 0.0
        %v2134 = vadd.f32 %v2132, %v2133
        %v2135 = vsel %vm982, %v1678, 0.0
        %v2136 = vadd.f32 %v2134, %v2135
        %v2137 = vsel %vm982, %v1683, 0.0
        %v2138 = vadd.f32 %v2136, %v2137
        %v2139 = vsel %vm982, %v1686, 0.0
        %v2140 = vadd.f32 %v2138, %v2139
        %v2141 = vsel %vm982, %v1691, 0.0
        %v2142 = vadd.f32 %v2140, %v2141
        %v2143 = vsel %vm982, %v1694, 0.0
        %v2144 = vadd.f32 %v2142, %v2143
        %v2145 = vrot.slane %v2144, 4
        %v2146 = vadd.f32 %v2144, %v2145
        %v2147 = vrot.slane %v2146, 2
        %v2148 = vadd.f32 %v2146, %v2147
        %v2149 = vrot.slane %v2148, 1
        %v2150 = vadd.f32 %v2148, %v2149
        %v2151 = vmul.f32 %v2150, 0.001953125
        %v2152 = vsub.f32 %v1443, %v2151
        %v2153 = vsub.f32 %v1446, %v2151
        %v2154 = vsub.f32 %v1451, %v2151
        %v2155 = vsub.f32 %v1454, %v2151
        %v2156 = vsub.f32 %v1459, %v2151
        %v2157 = vsub.f32 %v1462, %v2151
        %v2158 = vsub.f32 %v1467, %v2151
        %v2159 = vsub.f32 %v1470, %v2151
        %v2160 = vsub.f32 %v1475, %v2151
        %v2161 = vsub.f32 %v1478, %v2151
        %v2162 = vsub.f32 %v1483, %v2151
        %v2163 = vsub.f32 %v1486, %v2151
        %v2164 = vsub.f32 %v1491, %v2151
        %v2165 = vsub.f32 %v1494, %v2151
        %v2166 = vsub.f32 %v1499, %v2151
        %v2167 = vsub.f32 %v1502, %v2151
        %v2168 = vsub.f32 %v1507, %v2151
        %v2169 = vsub.f32 %v1510, %v2151
        %v2170 = vsub.f32 %v1515, %v2151
        %v2171 = vsub.f32 %v1518, %v2151
        %v2172 = vsub.f32 %v1523, %v2151
        %v2173 = vsub.f32 %v1526, %v2151
        %v2174 = vsub.f32 %v1531, %v2151
        %v2175 = vsub.f32 %v1534, %v2151
        %v2176 = vsub.f32 %v1539, %v2151
        %v2177 = vsub.f32 %v1542, %v2151
        %v2178 = vsub.f32 %v1547, %v2151
        %v2179 = vsub.f32 %v1550, %v2151
        %v2180 = vsub.f32 %v1555, %v2151
        %v2181 = vsub.f32 %v1558, %v2151
        %v2182 = vsub.f32 %v1563, %v2151
        %v2183 = vsub.f32 %v1566, %v2151
        %v2184 = vsub.f32 %v1571, %v2151
        %v2185 = vsub.f32 %v1574, %v2151
        %v2186 = vsub.f32 %v1579, %v2151
        %v2187 = vsub.f32 %v1582, %v2151
        %v2188 = vsub.f32 %v1587, %v2151
        %v2189 = vsub.f32 %v1590, %v2151
        %v2190 = vsub.f32 %v1595, %v2151
        %v2191 = vsub.f32 %v1598, %v2151
        %v2192 = vsub.f32 %v1603, %v2151
        %v2193 = vsub.f32 %v1606, %v2151
        %v2194 = vsub.f32 %v1611, %v2151
        %v2195 = vsub.f32 %v1614, %v2151
        %v2196 = vsub.f32 %v1619, %v2151
        %v2197 = vsub.f32 %v1622, %v2151
        %v2198 = vsub.f32 %v1627, %v2151
        %v2199 = vsub.f32 %v1630, %v2151
        %v2200 = vsub.f32 %v1635, %v2151
        %v2201 = vsub.f32 %v1638, %v2151
        %v2202 = vsub.f32 %v1643, %v2151
        %v2203 = vsub.f32 %v1646, %v2151
        %v2204 = vsub.f32 %v1651, %v2151
        %v2205 = vsub.f32 %v1654, %v2151
        %v2206 = vsub.f32 %v1659, %v2151
        %v2207 = vsub.f32 %v1662, %v2151
        %v2208 = vsub.f32 %v1667, %v2151
        %v2209 = vsub.f32 %v1670, %v2151
        %v2210 = vsub.f32 %v1675, %v2151
        %v2211 = vsub.f32 %v1678, %v2151
        %v2212 = vsub.f32 %v1683, %v2151
        %v2213 = vsub.f32 %v1686, %v2151
        %v2214 = vsub.f32 %v1691, %v2151
        %v2215 = vsub.f32 %v1694, %v2151
        %v2216 = vmul.f32 %v2152, %v2152
        %v2217 = vmul.f32 %v2153, %v2153
        %v2218 = vmul.f32 %v2154, %v2154
        %v2219 = vmul.f32 %v2155, %v2155
        %v2220 = vmul.f32 %v2156, %v2156
        %v2221 = vmul.f32 %v2157, %v2157
        %v2222 = vmul.f32 %v2158, %v2158
        %v2223 = vmul.f32 %v2159, %v2159
        %v2224 = vmul.f32 %v2160, %v2160
        %v2225 = vmul.f32 %v2161, %v2161
        %v2226 = vmul.f32 %v2162, %v2162
        %v2227 = vmul.f32 %v2163, %v2163
        %v2228 = vmul.f32 %v2164, %v2164
        %v2229 = vmul.f32 %v2165, %v2165
        %v2230 = vmul.f32 %v2166, %v2166
        %v2231 = vmul.f32 %v2167, %v2167
        %v2232 = vmul.f32 %v2168, %v2168
        %v2233 = vmul.f32 %v2169, %v2169
        %v2234 = vmul.f32 %v2170, %v2170
        %v2235 = vmul.f32 %v2171, %v2171
        %v2236 = vmul.f32 %v2172, %v2172
        %v2237 = vmul.f32 %v2173, %v2173
        %v2238 = vmul.f32 %v2174, %v2174
        %v2239 = vmul.f32 %v2175, %v2175
        %v2240 = vmul.f32 %v2176, %v2176
        %v2241 = vmul.f32 %v2177, %v2177
        %v2242 = vmul.f32 %v2178, %v2178
        %v2243 = vmul.f32 %v2179, %v2179
        %v2244 = vmul.f32 %v2180, %v2180
        %v2245 = vmul.f32 %v2181, %v2181
        %v2246 = vmul.f32 %v2182, %v2182
        %v2247 = vmul.f32 %v2183, %v2183
        %v2248 = vmul.f32 %v2184, %v2184
        %v2249 = vmul.f32 %v2185, %v2185
        %v2250 = vmul.f32 %v2186, %v2186
        %v2251 = vmul.f32 %v2187, %v2187
        %v2252 = vmul.f32 %v2188, %v2188
        %v2253 = vmul.f32 %v2189, %v2189
        %v2254 = vmul.f32 %v2190, %v2190
        %v2255 = vmul.f32 %v2191, %v2191
        %v2256 = vmul.f32 %v2192, %v2192
        %v2257 = vmul.f32 %v2193, %v2193
        %v2258 = vmul.f32 %v2194, %v2194
        %v2259 = vmul.f32 %v2195, %v2195
        %v2260 = vmul.f32 %v2196, %v2196
        %v2261 = vmul.f32 %v2197, %v2197
        %v2262 = vmul.f32 %v2198, %v2198
        %v2263 = vmul.f32 %v2199, %v2199
        %v2264 = vmul.f32 %v2200, %v2200
        %v2265 = vmul.f32 %v2201, %v2201
        %v2266 = vmul.f32 %v2202, %v2202
        %v2267 = vmul.f32 %v2203, %v2203
        %v2268 = vmul.f32 %v2204, %v2204
        %v2269 = vmul.f32 %v2205, %v2205
        %v2270 = vmul.f32 %v2206, %v2206
        %v2271 = vmul.f32 %v2207, %v2207
        %v2272 = vmul.f32 %v2208, %v2208
        %v2273 = vmul.f32 %v2209, %v2209
        %v2274 = vmul.f32 %v2210, %v2210
        %v2275 = vmul.f32 %v2211, %v2211
        %v2276 = vmul.f32 %v2212, %v2212
        %v2277 = vmul.f32 %v2213, %v2213
        %v2278 = vmul.f32 %v2214, %v2214
        %v2279 = vmul.f32 %v2215, %v2215
        %v2280 = vsel %vm982, %v2216, 0.0
        %v2281 = vsel %vm982, %v2217, 0.0
        %v2282 = vadd.f32 %v2280, %v2281
        %v2283 = vsel %vm982, %v2218, 0.0
        %v2284 = vadd.f32 %v2282, %v2283
        %v2285 = vsel %vm982, %v2219, 0.0
        %v2286 = vadd.f32 %v2284, %v2285
        %v2287 = vsel %vm982, %v2220, 0.0
        %v2288 = vadd.f32 %v2286, %v2287
        %v2289 = vsel %vm982, %v2221, 0.0
        %v2290 = vadd.f32 %v2288, %v2289
        %v2291 = vsel %vm982, %v2222, 0.0
        %v2292 = vadd.f32 %v2290, %v2291
        %v2293 = vsel %vm982, %v2223, 0.0
        %v2294 = vadd.f32 %v2292, %v2293
        %v2295 = vsel %vm982, %v2224, 0.0
        %v2296 = vadd.f32 %v2294, %v2295
        %v2297 = vsel %vm982, %v2225, 0.0
        %v2298 = vadd.f32 %v2296, %v2297
        %v2299 = vsel %vm982, %v2226, 0.0
        %v2300 = vadd.f32 %v2298, %v2299
        %v2301 = vsel %vm982, %v2227, 0.0
        %v2302 = vadd.f32 %v2300, %v2301
        %v2303 = vsel %vm982, %v2228, 0.0
        %v2304 = vadd.f32 %v2302, %v2303
        %v2305 = vsel %vm982, %v2229, 0.0
        %v2306 = vadd.f32 %v2304, %v2305
        %v2307 = vsel %vm982, %v2230, 0.0
        %v2308 = vadd.f32 %v2306, %v2307
        %v2309 = vsel %vm982, %v2231, 0.0
        %v2310 = vadd.f32 %v2308, %v2309
        %v2311 = vsel %vm982, %v2232, 0.0
        %v2312 = vadd.f32 %v2310, %v2311
        %v2313 = vsel %vm982, %v2233, 0.0
        %v2314 = vadd.f32 %v2312, %v2313
        %v2315 = vsel %vm982, %v2234, 0.0
        %v2316 = vadd.f32 %v2314, %v2315
        %v2317 = vsel %vm982, %v2235, 0.0
        %v2318 = vadd.f32 %v2316, %v2317
        %v2319 = vsel %vm982, %v2236, 0.0
        %v2320 = vadd.f32 %v2318, %v2319
        %v2321 = vsel %vm982, %v2237, 0.0
        %v2322 = vadd.f32 %v2320, %v2321
        %v2323 = vsel %vm982, %v2238, 0.0
        %v2324 = vadd.f32 %v2322, %v2323
        %v2325 = vsel %vm982, %v2239, 0.0
        %v2326 = vadd.f32 %v2324, %v2325
        %v2327 = vsel %vm982, %v2240, 0.0
        %v2328 = vadd.f32 %v2326, %v2327
        %v2329 = vsel %vm982, %v2241, 0.0
        %v2330 = vadd.f32 %v2328, %v2329
        %v2331 = vsel %vm982, %v2242, 0.0
        %v2332 = vadd.f32 %v2330, %v2331
        %v2333 = vsel %vm982, %v2243, 0.0
        %v2334 = vadd.f32 %v2332, %v2333
        %v2335 = vsel %vm982, %v2244, 0.0
        %v2336 = vadd.f32 %v2334, %v2335
        %v2337 = vsel %vm982, %v2245, 0.0
        %v2338 = vadd.f32 %v2336, %v2337
        %v2339 = vsel %vm982, %v2246, 0.0
        %v2340 = vadd.f32 %v2338, %v2339
        %v2341 = vsel %vm982, %v2247, 0.0
        %v2342 = vadd.f32 %v2340, %v2341
        %v2343 = vsel %vm982, %v2248, 0.0
        %v2344 = vadd.f32 %v2342, %v2343
        %v2345 = vsel %vm982, %v2249, 0.0
        %v2346 = vadd.f32 %v2344, %v2345
        %v2347 = vsel %vm982, %v2250, 0.0
        %v2348 = vadd.f32 %v2346, %v2347
        %v2349 = vsel %vm982, %v2251, 0.0
        %v2350 = vadd.f32 %v2348, %v2349
        %v2351 = vsel %vm982, %v2252, 0.0
        %v2352 = vadd.f32 %v2350, %v2351
        %v2353 = vsel %vm982, %v2253, 0.0
        %v2354 = vadd.f32 %v2352, %v2353
        %v2355 = vsel %vm982, %v2254, 0.0
        %v2356 = vadd.f32 %v2354, %v2355
        %v2357 = vsel %vm982, %v2255, 0.0
        %v2358 = vadd.f32 %v2356, %v2357
        %v2359 = vsel %vm982, %v2256, 0.0
        %v2360 = vadd.f32 %v2358, %v2359
        %v2361 = vsel %vm982, %v2257, 0.0
        %v2362 = vadd.f32 %v2360, %v2361
        %v2363 = vsel %vm982, %v2258, 0.0
        %v2364 = vadd.f32 %v2362, %v2363
        %v2365 = vsel %vm982, %v2259, 0.0
        %v2366 = vadd.f32 %v2364, %v2365
        %v2367 = vsel %vm982, %v2260, 0.0
        %v2368 = vadd.f32 %v2366, %v2367
        %v2369 = vsel %vm982, %v2261, 0.0
        %v2370 = vadd.f32 %v2368, %v2369
        %v2371 = vsel %vm982, %v2262, 0.0
        %v2372 = vadd.f32 %v2370, %v2371
        %v2373 = vsel %vm982, %v2263, 0.0
        %v2374 = vadd.f32 %v2372, %v2373
        %v2375 = vsel %vm982, %v2264, 0.0
        %v2376 = vadd.f32 %v2374, %v2375
        %v2377 = vsel %vm982, %v2265, 0.0
        %v2378 = vadd.f32 %v2376, %v2377
        %v2379 = vsel %vm982, %v2266, 0.0
        %v2380 = vadd.f32 %v2378, %v2379
        %v2381 = vsel %vm982, %v2267, 0.0
        %v2382 = vadd.f32 %v2380, %v2381
        %v2383 = vsel %vm982, %v2268, 0.0
        %v2384 = vadd.f32 %v2382, %v2383
        %v2385 = vsel %vm982, %v2269, 0.0
        %v2386 = vadd.f32 %v2384, %v2385
        %v2387 = vsel %vm982, %v2270, 0.0
        %v2388 = vadd.f32 %v2386, %v2387
        %v2389 = vsel %vm982, %v2271, 0.0
        %v2390 = vadd.f32 %v2388, %v2389
        %v2391 = vsel %vm982, %v2272, 0.0
        %v2392 = vadd.f32 %v2390, %v2391
        %v2393 = vsel %vm982, %v2273, 0.0
        %v2394 = vadd.f32 %v2392, %v2393
        %v2395 = vsel %vm982, %v2274, 0.0
        %v2396 = vadd.f32 %v2394, %v2395
        %v2397 = vsel %vm982, %v2275, 0.0
        %v2398 = vadd.f32 %v2396, %v2397
        %v2399 = vsel %vm982, %v2276, 0.0
        %v2400 = vadd.f32 %v2398, %v2399
        %v2401 = vsel %vm982, %v2277, 0.0
        %v2402 = vadd.f32 %v2400, %v2401
        %v2403 = vsel %vm982, %v2278, 0.0
        %v2404 = vadd.f32 %v2402, %v2403
        %v2405 = vsel %vm982, %v2279, 0.0
        %v2406 = vadd.f32 %v2404, %v2405
        %v2407 = vrot.slane %v2406, 4
        %v2408 = vadd.f32 %v2406, %v2407
        %v2409 = vrot.slane %v2408, 2
        %v2410 = vadd.f32 %v2408, %v2409
        %v2411 = vrot.slane %v2410, 1
        %v2412 = vadd.f32 %v2410, %v2411
        %vm2413 = vcmask 1040384
        %v2414 = vsel %vm2413, %v2150, %v2412
        %vm2415 = vcmask 58368
        %2416 = vst.msk [vmem:[%s234] sm:$0x3] %vm2415, %v2414
        %s2417 = sand.u32 %s96, 1
        %s2418 = scalar_lea.sflag [#allocation4], %s2417
        %s2419 = sand.u32 %s96, 1
        %s2420 = smul.addr %s2419, 256
        %s2421 = scalar_lea.vmem [#allocation7], %s2420
        %s2422 = sand.u32 %s124, 1
        %s2423 = scalar_lea.sflag [#allocation9], %s2422
        %s2424 = sand.u32 %s124, 1
        %s2425 = smul.addr %s2424, 2
        %s2426 = scalar_lea.vmem [#allocation8], %s2425
        // Predicated region
        $region37: #{up_conv_forward.2} parent=27 // pred_check
          %p2427 = pneg %p106
        $region38: #{up_conv_forward.2} parent=27 // pred_check_branch
          %2429 = sbr.rel (%p2427) target = $region40
        $region39: #{up_conv_forward.2} parent=27 // pred_region
          %s2430 = smul.u32 64, %s30
          %s2432 = ssub.s32 4096, 4096
          %2433 = vsyncadd %s2418, %s2432
          %s2434 = smul.addr %s29, 128
          %s2435 = sadd.s32 %s2430, %s2434
          %s2436 = smul.addr %s2435, 64
          %s2437 = scalar_lea.hbm %s2, %s2436
          %s2438 = sshll.u32 %s2421, 4
          %s2439 = int_to_ptr.vmem [resolvable:$true] %s2438
          %2444 = dma.vmem_to_hbm [thread:$0]  %s2439, 4096, %s2437, %s2418, 64, 64, 4
        $region40: #{up_conv_forward.2} parent=27 // pred_fallthru
          _
        // Predicated region
        $region41: #{up_conv_forward.2} parent=27 // pred_check
          %p2445 = pneg %p134
        $region42: #{up_conv_forward.2} parent=27 // pred_check_branch
          %2447 = sbr.rel (%p2445) target = $region44
        $region43: #{up_conv_forward.2} parent=27 // pred_region
          %s2449 = ssub.s32 32, 32
          %2450 = vsyncadd %s2423, %s2449
          %s2451 = smul.addr %s29, 2
          %s2452 = sadd.s32 %s30, %s2451
          %s2453 = smul.addr %s2452, 32
          %s2454 = scalar_lea.hbm %s3, %s2453
          %s2456 = sshll.u32 %s2426, 4
          %s2457 = int_to_ptr.vmem [resolvable:$true] %s2456
          %2459 = dma.vmem_to_hbm [thread:$0]  %s2457, 32, %s2454, %s2423
        $region44: #{up_conv_forward.2} parent=27 // pred_fallthru
          _
      $region28: #{up_conv_forward.2} parent=5 // pred_fallthru
        _
      %p2460 = scmp.le.s32.totalorder 2, %s20
      // Predicated region
      $region45: #{up_conv_forward.2} parent=5 // pred_check
        %p2461 = pneg %p2460
      $region46: #{up_conv_forward.2} parent=5 // pred_check_branch
        %2463 = sbr.rel (%p2461) target = $region48
      $region47: #{up_conv_forward.2} parent=5 // pred_region
        %s2464 = ssub.s32 %s20, 2
        // Predicated region
        $region49: #{up_conv_forward.2} parent=47 // pred_check
          %p2465 = pneg %p112
        $region50: #{up_conv_forward.2} parent=47 // pred_check_branch
          %2467 = sbr.rel (%p2465) target = $region52
        $region51: #{up_conv_forward.2} parent=47 // pred_region
          %s2468 = sand.u32 %s97, 1
          %s2469 = scalar_lea.sflag [#allocation4], %s2468
          %s2470 = sand.u32 %s97, 1
          %s2471 = smul.addr %s2470, 256
          %s2472 = scalar_lea.vmem [#allocation7], %s2471
          %2473 = dma.done %s2469, 4096
        $region52: #{up_conv_forward.2} parent=47 // pred_fallthru
          _
        // Predicated region
        $region53: #{up_conv_forward.2} parent=47 // pred_check
          %p2474 = pneg %p140
        $region54: #{up_conv_forward.2} parent=47 // pred_check_branch
          %2476 = sbr.rel (%p2474) target = $region56
        $region55: #{up_conv_forward.2} parent=47 // pred_region
          %s2477 = sand.u32 %s125, 1
          %s2478 = scalar_lea.sflag [#allocation9], %s2477
          %s2479 = sand.u32 %s125, 1
          %s2480 = smul.addr %s2479, 2
          %s2481 = scalar_lea.vmem [#allocation8], %s2480
          %2482 = dma.done %s2478, 32
        $region56: #{up_conv_forward.2} parent=47 // pred_fallthru
          _
      $region48: #{up_conv_forward.2} parent=5 // pred_fallthru
        _
    $region6: #{up_conv_forward.2} parent=1 // loop_footer
      %s24 = sadd.s32 1, %s20
    $region7: #{up_conv_forward.2} parent=1 // loop_footer_branch
      %19 = sbr.rel target = $region3
    $region8: #{up_conv_forward.2} parent=1 // loop_exit
      _
    %2483 = vsyncpa [#allocation3], 1
    %s2484 = scalar_lea.sflag [#allocation3], 1
    %2485 = vsyncpa %s2484, 1
    %2486 = vsyncpa [#allocation6], 1
    %2487 = vsyncpa [#allocation4], 1
    %s2488 = scalar_lea.sflag [#allocation4], 1
    %2489 = vsyncpa %s2488, 1
    %2490 = vsyncpa [#allocation9], 1
    %s2491 = scalar_lea.sflag [#allocation9], 1
    %2492 = vsyncpa %s2491, 1

</llo_original>
